<compile_context>
chip_gen: v7x
topology: tpu7x:2x2x1
jax: 0.10.0
libtpu: 0.0.40
codegen_flags: <defaults>
</compile_context>

<pallas_src>
import math

import jax
import jax.numpy as jnp
import numpy as np
from jax import lax
from jax.experimental import pallas as pl
from jax.experimental.pallas import tpu as pltpu


# ----------------------------- helpers ----------------------------------------
def _layernorm(v, eps=1e-6):
    mu = jnp.mean(v, axis=-1, keepdims=True)
    var = jnp.mean((v - mu) ** 2, axis=-1, keepdims=True)
    return (v - mu) * lax.rsqrt(var + eps)


def _gelu_tanh(h):
    # GELU(approximate='tanh') in f32 (VPU + EUP tanh).
    return 0.5 * h * (1.0 + jnp.tanh(0.7978845608028654 * (h + 0.044715 * h * h * h)))


def _pick_tile(n, target):
    """Largest row tile <= target that divides n and is a multiple of 8."""
    if n <= target:
        return n
    t = (min(target, n) // 8) * 8
    while t >= 8:
        if n % t == 0:
            return t
        t -= 8
    return n


def _vmem_cap():
    try:
        return int(pltpu.get_tpu_info().vmem_capacity_bytes)
    except Exception:
        return 64 << 20   # conservative default: v7x per-TensorCore VMEM


# ----------------------------- kernel bodies ----------------------------------
def _qkv_kernel(x_ref, mod_ref, wq_ref, bq_ref, wk_ref, bk_ref, wv_ref, bv_ref,
                q_ref, k_ref, v_ref):
    """adaLN-modulated LayerNorm + q/k/v projections for one (batch, row-tile)."""
    x = x_ref[0].astype(jnp.float32)             # (ts, C)
    mod = mod_ref[0].astype(jnp.float32)         # (6, C): rows 0/1 = shift/scale_msa
    x1 = (_layernorm(x) * (1.0 + mod[1:2, :]) + mod[0:1, :]).astype(jnp.bfloat16)
    # 1/sqrt(head_dim) already folded into wq / bq in the wrapper.
    q_ref[0] = (jnp.dot(x1, wq_ref[...], preferred_element_type=jnp.float32)
                + bq_ref[...]).astype(q_ref.dtype)
    k_ref[0] = (jnp.dot(x1, wk_ref[...], preferred_element_type=jnp.float32)
                + bk_ref[...]).astype(k_ref.dtype)
    v_ref[0] = (jnp.dot(x1, wv_ref[...], preferred_element_type=jnp.float32)
                + bv_ref[...]).astype(v_ref.dtype)


def _attn_kernel(q_ref, k_ref, v_ref, o_ref):
    """Batched-heads attention for one (batch, q-tile): full K/V, one einsum each."""
    q = q_ref[0]                                 # (heads, tq, hd) bf16
    k = k_ref[0]                                 # (heads, S,  hd) bf16
    v = v_ref[0]                                 # (heads, S,  hd) bf16
    s = jnp.einsum("hqd,hkd->hqk", q, k, preferred_element_type=jnp.float32)
    s = s - jnp.max(s, axis=-1, keepdims=True)
    p = jnp.exp(s)
    p = p * pl.reciprocal(jnp.sum(p, axis=-1, keepdims=True), approx=True)
    o = jnp.einsum("hqk,hkd->hqd", p.astype(jnp.bfloat16), v,
                   preferred_element_type=jnp.float32)
    o_ref[0] = o.astype(o_ref.dtype)


def _resid_mlp_kernel(x_ref, att_ref, mod_ref, out_w_ref, out_b_ref,
                      fc1_w_ref, fc1_b_ref, fc2_w_ref, fc2_b_ref, o_ref):
    """Attention out-projection + gated residual + adaLN-LN + MLP + gated residual."""
    x = x_ref[0].astype(jnp.float32)             # (tq, C) residual stream, f32
    mod = mod_ref[0].astype(jnp.float32)         # rows 2..5: gate_msa, shift/scale/gate_mlp
    att = (jnp.dot(att_ref[0], out_w_ref[...], preferred_element_type=jnp.float32)
           + out_b_ref[...])
    x = x + mod[2:3, :] * att                    # drop_path(rate=0.0) == identity
    x2 = _layernorm(x) * (1.0 + mod[4:5, :]) + mod[3:4, :]
    h1 = (jnp.dot(x2.astype(jnp.bfloat16), fc1_w_ref[...],
                  preferred_element_type=jnp.float32) + fc1_b_ref[...])
    g = _gelu_tanh(h1)
    mlp = (jnp.dot(g.astype(jnp.bfloat16), fc2_w_ref[...],
                   preferred_element_type=jnp.float32) + fc2_b_ref[...])
    o_ref[0] = (x + mod[5:6, :] * mlp).astype(o_ref.dtype)


# ----------------------------- wrapper -----------------------------------------
def dit_block_pallas(x, c, params, heads, *, q_tile=256, proj_tile=256,
                     single_buffer_weights=True):
    B, S, C = x.shape
    hd = C // heads
    HID = params["fc1_w"].shape[-1]
    qk_scale = 1.0 / math.sqrt(hd)
    f32, bf16 = jnp.float32, jnp.bfloat16

    # adaLN modulation (SiLU + 1xCx6C linear): tiny, done in the wrapper so the
    # kernels never slice lane-unaligned 6C chunks. Passed as (B, 6, C).
    c32 = c.astype(f32)
    mod = ((c32 * jax.nn.sigmoid(c32)) @ params["ada_w"].astype(f32)
           + params["ada_b"].astype(f32)).reshape(B, 6, C)

    # Split the in-projection per q/k/v (no in-kernel 3C column slicing); fold
    # 1/sqrt(head_dim) into the q weight AND bias (PyTorch scales q after bias).
    in_w = params["in_w"].astype(f32)
    in_b = params["in_b"].astype(f32)
    wq = (in_w[:, 0:C] * qk_scale).astype(bf16)
    bq = (in_b[:, 0:C] * qk_scale).astype(f32)
    wk = in_w[:, C:2 * C].astype(bf16)
    bk = in_b[:, C:2 * C].astype(f32)
    wv = in_w[:, 2 * C:3 * C].astype(bf16)
    bv = in_b[:, 2 * C:3 * C].astype(f32)
    out_w = params["out_w"].astype(bf16); out_b = params["out_b"].astype(f32)
    fc1_w = params["fc1_w"].astype(bf16); fc1_b = params["fc1_b"].astype(f32)
    fc2_w = params["fc2_w"].astype(bf16); fc2_b = params["fc2_b"].astype(f32)

    ts = _pick_tile(S, proj_tile)   # rows per step, qkv-projection kernel
    tq = _pick_tile(S, q_tile)      # query rows per step, attention / MLP kernels

    cap = _vmem_cap()
    headroom = 6 << 20

    def _limit(need):
        # Never request more than physical VMEM minus headroom (v7x = 64 MiB).
        return int(min(cap - headroom, max(need + (2 << 20), 32 << 20)))

    def _run(single_buf):
        wbuf = 1 if single_buf else 2

        def wspec(w):
            nd = w.ndim
            if single_buf:
                # Grid-invariant weights: single-buffer (constant index_map).
                return pl.BlockSpec(w.shape, lambda b, i, _n=nd: (0,) * _n,
                                    pipeline_mode=pl.Buffered(1))
            return pl.BlockSpec(w.shape, lambda b, i, _n=nd: (0,) * _n)

        # ---- kernel A: adaLN-LN(x) -> q, k, v (bf16) -------------------------
        need_a = (wbuf * (3 * C * C * 2 + 3 * C * 4)
                  + 2 * ts * C * 4 + 2 * 6 * C * 4
                  + 6 * ts * C * 2            # three double-buffered bf16 outputs
                  + 6 * ts * C * 4)           # in-kernel f32/bf16 temporaries
        cost_a = pl.CostEstimate(
            flops=int(6 * B * S * C * C),
            transcendentals=int(B * S),
            bytes_accessed=int(B * S * C * (4 + 3 * 2) + 3 * C * C * 2 + B * 6 * C * 4))
        q, k, v = pl.pallas_call(
            _qkv_kernel,
            out_shape=tuple(jax.ShapeDtypeStruct((B, S, C), bf16) for _ in range(3)),
            grid=(B, S // ts),
            in_specs=[pl.BlockSpec((1, ts, C), lambda b, i: (b, i, 0)),
                      pl.BlockSpec((1, 6, C), lambda b, i: (b, 0, 0)),
                      wspec(wq), wspec(bq), wspec(wk), wspec(bk), wspec(wv), wspec(bv)],
            out_specs=tuple(pl.BlockSpec((1, ts, C), lambda b, i: (b, i, 0))
                            for _ in range(3)),
            compiler_params=pltpu.CompilerParams(
                dimension_semantics=("parallel", "parallel"),
                vmem_limit_bytes=_limit(need_a)),
            cost_estimate=cost_a,
        )(x, mod, wq, bq, wk, bk, wv, bv)

        # Head split as a cheap XLA bf16 transpose so the attention kernel sees
        # head-major blocks: no in-kernel relayouts, no masked partial stores.
        def _split(t):
            return t.reshape(B, S, heads, hd).transpose(0, 2, 1, 3)
        qh, kh, vh = _split(q), _split(k), _split(v)

        # ---- kernel B: batched-heads attention (q-tiled) ---------------------
        need_b = (2 * heads * tq * hd * 2        # q blocks
                  + 4 * heads * S * hd * 2       # K/V blocks
                  + 2 * heads * tq * hd * 2      # output blocks
                  + heads * tq * S * (4 + 4 + 2) # scores f32, exp f32, p bf16
                  + heads * tq * hd * 4)
        cost_b = pl.CostEstimate(
            flops=int(4 * B * S * S * C),
            transcendentals=int(B * heads * S * S + B * heads * S),
            bytes_accessed=int(B * heads * S * hd * 2 * (2 + 2 * (S // tq))))
        oh = pl.pallas_call(
            _attn_kernel,
            out_shape=jax.ShapeDtypeStruct((B, heads, S, hd), bf16),
            grid=(B, S // tq),
            in_specs=[pl.BlockSpec((1, heads, tq, hd), lambda b, i: (b, 0, i, 0)),
                      pl.BlockSpec((1, heads, S, hd), lambda b, i: (b, 0, 0, 0)),
                      pl.BlockSpec((1, heads, S, hd), lambda b, i: (b, 0, 0, 0))],
            out_specs=pl.BlockSpec((1, heads, tq, hd), lambda b, i: (b, 0, i, 0)),
            compiler_params=pltpu.CompilerParams(
                dimension_semantics=("parallel", "parallel"),
                vmem_limit_bytes=_limit(need_b)),
            cost_estimate=cost_b,
        )(qh, kh, vh)

        # Merge heads back to a lane-dense (B, S, C) slab (cheap XLA transpose).
        att = oh.transpose(0, 2, 1, 3).reshape(B, S, C)

        # ---- kernel C: out-proj + gated residual + adaLN-LN + MLP ------------
        need_c = (wbuf * ((C * C + 2 * C * HID) * 2 + (2 * C + HID) * 4)
                  + 2 * tq * C * 4 + 2 * tq * C * 2 + 2 * 6 * C * 4
                  + 2 * tq * C * 4
                  + 6 * tq * C * 4 + tq * HID * (4 + 4 + 2))
        cost_c = pl.CostEstimate(
            flops=int(2 * B * S * (C * C + 2 * C * HID)),
            transcendentals=int(B * S * (HID + 2)),
            bytes_accessed=int(B * S * C * (4 + 2 + 4)
                               + (C * C + 2 * C * HID) * 2 + B * 6 * C * 4))
        return pl.pallas_call(
            _resid_mlp_kernel,
            out_shape=jax.ShapeDtypeStruct((B, S, C), x.dtype),
            grid=(B, S // tq),
            in_specs=[pl.BlockSpec((1, tq, C), lambda b, i: (b, i, 0)),
                      pl.BlockSpec((1, tq, C), lambda b, i: (b, i, 0)),
                      pl.BlockSpec((1, 6, C), lambda b, i: (b, 0, 0)),
                      wspec(out_w), wspec(out_b),
                      wspec(fc1_w), wspec(fc1_b), wspec(fc2_w), wspec(fc2_b)],
            out_specs=pl.BlockSpec((1, tq, C), lambda b, i: (b, i, 0)),
            compiler_params=pltpu.CompilerParams(
                dimension_semantics=("parallel", "parallel"),
                vmem_limit_bytes=_limit(need_c)),
            cost_estimate=cost_c,
        )(x, att, mod, out_w, out_b, fc1_w, fc1_b, fc2_w, fc2_b)

    if single_buffer_weights:
        try:
            return jax.block_until_ready(_run(True))
        except Exception:
            # pipeline_mode=pl.Buffered(1) not supported by this jax build;
            # fall back to default double-buffered weight blocks.
            pass
    return _run(False)


# ----------------------------- pure-JAX reference ------------------------------
def dit_block_ref(x, c, params, heads):
    C = x.shape[-1]
    hd = C // heads

    def ln(v):
        mu = jnp.mean(v, axis=-1, keepdims=True)
        var = jnp.mean((v - mu) ** 2, axis=-1, keepdims=True)
        return (v - mu) / jnp.sqrt(var + 1e-6)

    c_silu = c * jax.nn.sigmoid(c)
    mod = c_silu @ params["ada_w"] + params["ada_b"][0]
    (shift_msa, scale_msa, gate_msa,
     shift_mlp, scale_mlp, gate_mlp) = jnp.split(mod, 6, axis=-1)

    x1 = ln(x) * (1.0 + scale_msa[:, None, :]) + shift_msa[:, None, :]
    qkv = x1 @ params["in_w"] + params["in_b"][0]
    q, k, v = jnp.split(qkv, 3, axis=-1)
    B, S, _ = x.shape
    q = q.reshape(B, S, heads, hd).transpose(0, 2, 1, 3) / math.sqrt(hd)
    k = k.reshape(B, S, heads, hd).transpose(0, 2, 1, 3)
    v = v.reshape(B, S, heads, hd).transpose(0, 2, 1, 3)
    s = jnp.einsum("bhqd,bhkd->bhqk", q, k)
    p = jax.nn.softmax(s, axis=-1)
    att = jnp.einsum("bhqk,bhkd->bhqd", p, v).transpose(0, 2, 1, 3).reshape(B, S, C)
    att = att @ params["out_w"] + params["out_b"][0]
    x = x + gate_msa[:, None, :] * att

    x2 = ln(x) * (1.0 + scale_mlp[:, None, :]) + shift_mlp[:, None, :]
    h1 = x2 @ params["fc1_w"] + params["fc1_b"][0]
    g = 0.5 * h1 * (1.0 + jnp.tanh(0.7978845608028654 * (h1 + 0.044715 * h1 ** 3)))
    mlp = g @ params["fc2_w"] + params["fc2_b"][0]
    return x + gate_mlp[:, None, :] * mlp


# ----------------------------- main --------------------------------------------
if __name__ == "__main__":
    B, S, C, HEADS, MLP_RATIO = 2, 8, 32, 4, 4
    HID = C * MLP_RATIO

    key = jax.random.PRNGKey(0)
    keys = jax.random.split(key, 12)

    def init(k, shape, scale=0.05):
        return (scale * jax.random.normal(k, shape)).astype(jnp.float32)

    x = init(keys[0], (B, S, C), 1.0)
    c = init(keys[1], (B, C), 1.0)

    # Parameters (pre-transposed for right-multiplication; biases as (1, N)).
    params = {
        "ada_w":  init(keys[2], (C, 6 * C)),
        "ada_b":  init(keys[3], (1, 6 * C)),
        "in_w":   init(keys[4], (C, 3 * C)),     # == in_proj_weight.T
        "in_b":   init(keys[5], (1, 3 * C)),
        "out_w":  init(keys[6], (C, C)),         # == out_proj.weight.T
        "out_b":  init(keys[7], (1, C)),
        "fc1_w":  init(keys[8], (C, HID)),
        "fc1_b":  init(keys[9], (1, HID)),
        "fc2_w":  init(keys[10], (HID, C)),
        "fc2_b":  init(keys[11], (1, C)),
    }

    out = dit_block_pallas(x, c, params, HEADS)
    out = jax.block_until_ready(out)

    ref = dit_block_ref(x, c, params, HEADS)
    # Tolerance accounts for bf16 MXU operands, bf16 q/k/v/att HBM round-trips
    # and the approximate EUP reciprocal in the softmax.
    np.testing.assert_allclose(np.asarray(out), np.asarray(ref), atol=2e-2, rtol=2e-2)

    print("KERNEL_OK")
</pallas_src>

<mosaic_0001>
module attributes {stable_mosaic.version = 11 : i64} {
  func.func @_qkv_kernel(%arg0: i32, %arg1: i32, %arg2: memref<1x8x32xf32, #tpu.memory_space<vmem>>, %arg3: memref<1x6x32xf32, #tpu.memory_space<vmem>>, %arg4: memref<32x32xbf16, #tpu.memory_space<vmem>>, %arg5: memref<1x32xf32, #tpu.memory_space<vmem>>, %arg6: memref<32x32xbf16, #tpu.memory_space<vmem>>, %arg7: memref<1x32xf32, #tpu.memory_space<vmem>>, %arg8: memref<32x32xbf16, #tpu.memory_space<vmem>>, %arg9: memref<1x32xf32, #tpu.memory_space<vmem>>, %arg10: memref<1x8x32xbf16, #tpu.memory_space<vmem>>, %arg11: memref<1x8x32xbf16, #tpu.memory_space<vmem>>, %arg12: memref<1x8x32xbf16, #tpu.memory_space<vmem>>) attributes {dimension_semantics = [#tpu.dimension_semantics<parallel>, #tpu.dimension_semantics<parallel>], iteration_bounds = array<i64: 2, 1>, scalar_prefetch = 0 : i64, scratch_operands = 0 : i64, tpu.core_type = #tpu.core_type<tc>, window_params = [{transform_indices = @transform_0, window_bounds = array<i64: 1, 8, 32>}, {transform_indices = @transform_1, window_bounds = array<i64: 1, 6, 32>}, {pipeline_mode = #tpu.pipeline_mode<synchronous>, transform_indices = @transform_2, window_bounds = array<i64: 32, 32>}, {pipeline_mode = #tpu.pipeline_mode<synchronous>, transform_indices = @transform_3, window_bounds = array<i64: 1, 32>}, {pipeline_mode = #tpu.pipeline_mode<synchronous>, transform_indices = @transform_4, window_bounds = array<i64: 32, 32>}, {pipeline_mode = #tpu.pipeline_mode<synchronous>, transform_indices = @transform_5, window_bounds = array<i64: 1, 32>}, {pipeline_mode = #tpu.pipeline_mode<synchronous>, transform_indices = @transform_6, window_bounds = array<i64: 32, 32>}, {pipeline_mode = #tpu.pipeline_mode<synchronous>, transform_indices = @transform_7, window_bounds = array<i64: 1, 32>}, {transform_indices = @transform_8, window_bounds = array<i64: 1, 8, 32>}, {transform_indices = @transform_9, window_bounds = array<i64: 1, 8, 32>}, {transform_indices = @transform_10, window_bounds = array<i64: 1, 8, 32>}]} {
    %c0 = arith.constant 0 : index
    %c0_0 = arith.constant 0 : index
    %c0_1 = arith.constant 0 : index
    %0 = vector.load %arg2[%c0, %c0_0, %c0_1] : memref<1x8x32xf32, #tpu.memory_space<vmem>>, vector<1x8x32xf32>
    %1 = vector.shape_cast %0 : vector<1x8x32xf32> to vector<8x32xf32>
    %c0_2 = arith.constant 0 : index
    %c0_3 = arith.constant 0 : index
    %c0_4 = arith.constant 0 : index
    %2 = vector.load %arg3[%c0_2, %c0_3, %c0_4] : memref<1x6x32xf32, #tpu.memory_space<vmem>>, vector<1x6x32xf32>
    %3 = vector.shape_cast %2 : vector<1x6x32xf32> to vector<6x32xf32>
    %cst = arith.constant dense<0.000000e+00> : vector<8xf32>
    %4 = vector.multi_reduction <add>, %1, %cst [1] : vector<8x32xf32> to vector<8xf32>
    %5 = vector.shape_cast %4 : vector<8xf32> to vector<8x1xf32>
    %cst_5 = arith.constant 3.200000e+01 : f32
    %6 = vector.broadcast %cst_5 : f32 to vector<8x1xf32>
    %7 = arith.divf %5, %6 : vector<8x1xf32>
    %8 = vector.broadcast %7 : vector<8x1xf32> to vector<8x32xf32>
    %9 = arith.subf %1, %8 : vector<8x32xf32>
    %10 = arith.mulf %9, %9 : vector<8x32xf32>
    %cst_6 = arith.constant dense<0.000000e+00> : vector<8xf32>
    %11 = vector.multi_reduction <add>, %10, %cst_6 [1] : vector<8x32xf32> to vector<8xf32>
    %12 = vector.shape_cast %11 : vector<8xf32> to vector<8x1xf32>
    %cst_7 = arith.constant 3.200000e+01 : f32
    %13 = vector.broadcast %cst_7 : f32 to vector<8x1xf32>
    %14 = arith.divf %12, %13 : vector<8x1xf32>
    %15 = vector.broadcast %7 : vector<8x1xf32> to vector<8x32xf32>
    %16 = arith.subf %1, %15 : vector<8x32xf32>
    %cst_8 = arith.constant 9.99999997E-7 : f32
    %17 = vector.broadcast %cst_8 : f32 to vector<8x1xf32>
    %18 = arith.addf %14, %17 : vector<8x1xf32>
    %19 = math.rsqrt %18 : vector<8x1xf32>
    %20 = vector.broadcast %19 : vector<8x1xf32> to vector<8x32xf32>
    %21 = arith.mulf %16, %20 : vector<8x32xf32>
    %22 = vector.extract_strided_slice %3 {offsets = [1, 0], sizes = [1, 32], strides = [1, 1]} : vector<6x32xf32> to vector<1x32xf32>
    %cst_9 = arith.constant 1.000000e+00 : f32
    %23 = vector.broadcast %cst_9 : f32 to vector<1x32xf32>
    %24 = arith.addf %23, %22 : vector<1x32xf32>
    %25 = vector.broadcast %24 : vector<1x32xf32> to vector<8x32xf32>
    %26 = arith.mulf %21, %25 : vector<8x32xf32>
    %27 = vector.extract_strided_slice %3 {offsets = [0, 0], sizes = [1, 32], strides = [1, 1]} : vector<6x32xf32> to vector<1x32xf32>
    %28 = vector.broadcast %27 : vector<1x32xf32> to vector<8x32xf32>
    %29 = arith.addf %26, %28 : vector<8x32xf32>
    %30 = arith.truncf %29 : vector<8x32xf32> to vector<8x32xbf16>
    %c0_10 = arith.constant 0 : index
    %c0_11 = arith.constant 0 : index
    %31 = vector.load %arg4[%c0_10, %c0_11] : memref<32x32xbf16, #tpu.memory_space<vmem>>, vector<32x32xbf16>
    %cst_12 = arith.constant dense<0.000000e+00> : vector<8x32xf32>
    %32 = tpu.matmul %30, %31, %cst_12 {dimension_numbers = #tpu.dot_dimension_numbers<[1], [0], [0], [1], [0, 0, 1, 1], [], []>} : vector<8x32xbf16>, vector<32x32xbf16>, vector<8x32xf32> -> vector<8x32xf32>
    %c0_13 = arith.constant 0 : index
    %c0_14 = arith.constant 0 : index
    %33 = vector.load %arg5[%c0_13, %c0_14] : memref<1x32xf32, #tpu.memory_space<vmem>>, vector<1x32xf32>
    %34 = vector.broadcast %33 : vector<1x32xf32> to vector<8x32xf32>
    %35 = arith.addf %32, %34 : vector<8x32xf32>
    %36 = arith.truncf %35 : vector<8x32xf32> to vector<8x32xbf16>
    %c0_15 = arith.constant 0 : index
    %c0_16 = arith.constant 0 : index
    %c0_17 = arith.constant 0 : index
    %37 = vector.load %arg10[%c0_15, %c0_16, %c0_17] : memref<1x8x32xbf16, #tpu.memory_space<vmem>>, vector<1x8x32xbf16>
    %38 = vector.shape_cast %37 : vector<1x8x32xbf16> to vector<8x32xbf16>
    %39 = vector.shape_cast %36 : vector<8x32xbf16> to vector<1x8x32xbf16>
    tpu.vector_store %arg10[%c0_15, %c0_16, %c0_17], %39 {strides = array<i32>} : memref<1x8x32xbf16, #tpu.memory_space<vmem>>, vector<1x8x32xbf16>,
    %c0_18 = arith.constant 0 : index
    %c0_19 = arith.constant 0 : index
    %40 = vector.load %arg6[%c0_18, %c0_19] : memref<32x32xbf16, #tpu.memory_space<vmem>>, vector<32x32xbf16>
    %cst_20 = arith.constant dense<0.000000e+00> : vector<8x32xf32>
    %41 = tpu.matmul %30, %40, %cst_20 {dimension_numbers = #tpu.dot_dimension_numbers<[1], [0], [0], [1], [0, 0, 1, 1], [], []>} : vector<8x32xbf16>, vector<32x32xbf16>, vector<8x32xf32> -> vector<8x32xf32>
    %c0_21 = arith.constant 0 : index
    %c0_22 = arith.constant 0 : index
    %42 = vector.load %arg7[%c0_21, %c0_22] : memref<1x32xf32, #tpu.memory_space<vmem>>, vector<1x32xf32>
    %43 = vector.broadcast %42 : vector<1x32xf32> to vector<8x32xf32>
    %44 = arith.addf %41, %43 : vector<8x32xf32>
    %45 = arith.truncf %44 : vector<8x32xf32> to vector<8x32xbf16>
    %c0_23 = arith.constant 0 : index
    %c0_24 = arith.constant 0 : index
    %c0_25 = arith.constant 0 : index
    %46 = vector.load %arg11[%c0_23, %c0_24, %c0_25] : memref<1x8x32xbf16, #tpu.memory_space<vmem>>, vector<1x8x32xbf16>
    %47 = vector.shape_cast %46 : vector<1x8x32xbf16> to vector<8x32xbf16>
    %48 = vector.shape_cast %45 : vector<8x32xbf16> to vector<1x8x32xbf16>
    tpu.vector_store %arg11[%c0_23, %c0_24, %c0_25], %48 {strides = array<i32>} : memref<1x8x32xbf16, #tpu.memory_space<vmem>>, vector<1x8x32xbf16>,
    %c0_26 = arith.constant 0 : index
    %c0_27 = arith.constant 0 : index
    %49 = vector.load %arg8[%c0_26, %c0_27] : memref<32x32xbf16, #tpu.memory_space<vmem>>, vector<32x32xbf16>
    %cst_28 = arith.constant dense<0.000000e+00> : vector<8x32xf32>
    %50 = tpu.matmul %30, %49, %cst_28 {dimension_numbers = #tpu.dot_dimension_numbers<[1], [0], [0], [1], [0, 0, 1, 1], [], []>} : vector<8x32xbf16>, vector<32x32xbf16>, vector<8x32xf32> -> vector<8x32xf32>
    %c0_29 = arith.constant 0 : index
    %c0_30 = arith.constant 0 : index
    %51 = vector.load %arg9[%c0_29, %c0_30] : memref<1x32xf32, #tpu.memory_space<vmem>>, vector<1x32xf32>
    %52 = vector.broadcast %51 : vector<1x32xf32> to vector<8x32xf32>
    %53 = arith.addf %50, %52 : vector<8x32xf32>
    %54 = arith.truncf %53 : vector<8x32xf32> to vector<8x32xbf16>
    %c0_31 = arith.constant 0 : index
    %c0_32 = arith.constant 0 : index
    %c0_33 = arith.constant 0 : index
    %55 = vector.load %arg12[%c0_31, %c0_32, %c0_33] : memref<1x8x32xbf16, #tpu.memory_space<vmem>>, vector<1x8x32xbf16>
    %56 = vector.shape_cast %55 : vector<1x8x32xbf16> to vector<8x32xbf16>
    %57 = vector.shape_cast %54 : vector<8x32xbf16> to vector<1x8x32xbf16>
    tpu.vector_store %arg12[%c0_31, %c0_32, %c0_33], %57 {strides = array<i32>} : memref<1x8x32xbf16, #tpu.memory_space<vmem>>, vector<1x8x32xbf16>,
    return
  }
  func.func @transform_0(%arg0: i32, %arg1: i32) -> (i32, i32, i32) {
    %c0_i32 = arith.constant 0 : i32
    %c0_i32_0 = arith.constant 0 : i32
    return %arg0, %arg1, %c0_i32 : i32, i32, i32
  }
  func.func @transform_1(%arg0: i32, %arg1: i32) -> (i32, i32, i32) {
    %c0_i32 = arith.constant 0 : i32
    %c0_i32_0 = arith.constant 0 : i32
    %c0_i32_1 = arith.constant 0 : i32
    return %arg0, %c0_i32, %c0_i32_0 : i32, i32, i32
  }
  func.func @transform_2(%arg0: i32, %arg1: i32) -> (i32, i32) {
    %c0_i32 = arith.constant 0 : i32
    %c0_i32_0 = arith.constant 0 : i32
    %c0_i32_1 = arith.constant 0 : i32
    return %c0_i32, %c0_i32_0 : i32, i32
  }
  func.func @transform_3(%arg0: i32, %arg1: i32) -> (i32, i32) {
    %c0_i32 = arith.constant 0 : i32
    %c0_i32_0 = arith.constant 0 : i32
    %c0_i32_1 = arith.constant 0 : i32
    return %c0_i32, %c0_i32_0 : i32, i32
  }
  func.func @transform_4(%arg0: i32, %arg1: i32) -> (i32, i32) {
    %c0_i32 = arith.constant 0 : i32
    %c0_i32_0 = arith.constant 0 : i32
    %c0_i32_1 = arith.constant 0 : i32
    return %c0_i32, %c0_i32_0 : i32, i32
  }
  func.func @transform_5(%arg0: i32, %arg1: i32) -> (i32, i32) {
    %c0_i32 = arith.constant 0 : i32
    %c0_i32_0 = arith.constant 0 : i32
    %c0_i32_1 = arith.constant 0 : i32
    return %c0_i32, %c0_i32_0 : i32, i32
  }
  func.func @transform_6(%arg0: i32, %arg1: i32) -> (i32, i32) {
    %c0_i32 = arith.constant 0 : i32
    %c0_i32_0 = arith.constant 0 : i32
    %c0_i32_1 = arith.constant 0 : i32
    return %c0_i32, %c0_i32_0 : i32, i32
  }
  func.func @transform_7(%arg0: i32, %arg1: i32) -> (i32, i32) {
    %c0_i32 = arith.constant 0 : i32
    %c0_i32_0 = arith.constant 0 : i32
    %c0_i32_1 = arith.constant 0 : i32
    return %c0_i32, %c0_i32_0 : i32, i32
  }
  func.func @transform_8(%arg0: i32, %arg1: i32) -> (i32, i32, i32) {
    %c0_i32 = arith.constant 0 : i32
    %c0_i32_0 = arith.constant 0 : i32
    return %arg0, %arg1, %c0_i32 : i32, i32, i32
  }
  func.func @transform_9(%arg0: i32, %arg1: i32) -> (i32, i32, i32) {
    %c0_i32 = arith.constant 0 : i32
    %c0_i32_0 = arith.constant 0 : i32
    return %arg0, %arg1, %c0_i32 : i32, i32, i32
  }
  func.func @transform_10(%arg0: i32, %arg1: i32) -> (i32, i32, i32) {
    %c0_i32 = arith.constant 0 : i32
    %c0_i32_0 = arith.constant 0 : i32
    return %arg0, %arg1, %c0_i32 : i32, i32, i32
  }
}

module attributes {stable_mosaic.version = 11 : i64} {
  func.func @_qkv_kernel(%arg0: i32, %arg1: i32, %arg2: memref<1x8x32xf32, #tpu.memory_space<vmem>>, %arg3: memref<1x6x32xf32, #tpu.memory_space<vmem>>, %arg4: memref<32x32xbf16, #tpu.memory_space<vmem>>, %arg5: memref<1x32xf32, #tpu.memory_space<vmem>>, %arg6: memref<32x32xbf16, #tpu.memory_space<vmem>>, %arg7: memref<1x32xf32, #tpu.memory_space<vmem>>, %arg8: memref<32x32xbf16, #tpu.memory_space<vmem>>, %arg9: memref<1x32xf32, #tpu.memory_space<vmem>>, %arg10: memref<1x8x32xbf16, #tpu.memory_space<vmem>>, %arg11: memref<1x8x32xbf16, #tpu.memory_space<vmem>>, %arg12: memref<1x8x32xbf16, #tpu.memory_space<vmem>>) attributes {dimension_semantics = [#tpu.dimension_semantics<parallel>, #tpu.dimension_semantics<parallel>], iteration_bounds = array<i64: 2, 1>, scalar_prefetch = 0 : i64, scratch_operands = 0 : i64, tpu.core_type = #tpu.core_type<tc>, window_params = [{transform_indices = @transform_0, window_bounds = array<i64: 1, 8, 32>}, {transform_indices = @transform_1, window_bounds = array<i64: 1, 6, 32>}, {pipeline_mode = #tpu.pipeline_mode<synchronous>, transform_indices = @transform_2, window_bounds = array<i64: 32, 32>}, {pipeline_mode = #tpu.pipeline_mode<synchronous>, transform_indices = @transform_3, window_bounds = array<i64: 1, 32>}, {pipeline_mode = #tpu.pipeline_mode<synchronous>, transform_indices = @transform_4, window_bounds = array<i64: 32, 32>}, {pipeline_mode = #tpu.pipeline_mode<synchronous>, transform_indices = @transform_5, window_bounds = array<i64: 1, 32>}, {pipeline_mode = #tpu.pipeline_mode<synchronous>, transform_indices = @transform_6, window_bounds = array<i64: 32, 32>}, {pipeline_mode = #tpu.pipeline_mode<synchronous>, transform_indices = @transform_7, window_bounds = array<i64: 1, 32>}, {transform_indices = @transform_8, window_bounds = array<i64: 1, 8, 32>}, {transform_indices = @transform_9, window_bounds = array<i64: 1, 8, 32>}, {transform_indices = @transform_10, window_bounds = array<i64: 1, 8, 32>}]} {
    %c0 = arith.constant 0 : index
    %c0_0 = arith.constant 0 : index
    %c0_1 = arith.constant 0 : index
    %0 = vector.load %arg2[%c0, %c0_0, %c0_1] : memref<1x8x32xf32, #tpu.memory_space<vmem>>, vector<1x8x32xf32>
    %1 = vector.shape_cast %0 : vector<1x8x32xf32> to vector<8x32xf32>
    %c0_2 = arith.constant 0 : index
    %c0_3 = arith.constant 0 : index
    %c0_4 = arith.constant 0 : index
    %2 = vector.load %arg3[%c0_2, %c0_3, %c0_4] : memref<1x6x32xf32, #tpu.memory_space<vmem>>, vector<1x6x32xf32>
    %3 = vector.shape_cast %2 : vector<1x6x32xf32> to vector<6x32xf32>
    %cst = arith.constant dense<0.000000e+00> : vector<8xf32>
    %4 = vector.multi_reduction <add>, %1, %cst [1] : vector<8x32xf32> to vector<8xf32>
    %5 = vector.shape_cast %4 : vector<8xf32> to vector<8x1xf32>
    %cst_5 = arith.constant 3.200000e+01 : f32
    %6 = vector.broadcast %cst_5 : f32 to vector<8x1xf32>
    %7 = arith.divf %5, %6 : vector<8x1xf32>
    %8 = vector.broadcast %7 : vector<8x1xf32> to vector<8x32xf32>
    %9 = arith.subf %1, %8 : vector<8x32xf32>
    %10 = arith.mulf %9, %9 : vector<8x32xf32>
    %cst_6 = arith.constant dense<0.000000e+00> : vector<8xf32>
    %11 = vector.multi_reduction <add>, %10, %cst_6 [1] : vector<8x32xf32> to vector<8xf32>
    %12 = vector.shape_cast %11 : vector<8xf32> to vector<8x1xf32>
    %cst_7 = arith.constant 3.200000e+01 : f32
    %13 = vector.broadcast %cst_7 : f32 to vector<8x1xf32>
    %14 = arith.divf %12, %13 : vector<8x1xf32>
    %15 = vector.broadcast %7 : vector<8x1xf32> to vector<8x32xf32>
    %16 = arith.subf %1, %15 : vector<8x32xf32>
    %cst_8 = arith.constant 9.99999997E-7 : f32
    %17 = vector.broadcast %cst_8 : f32 to vector<8x1xf32>
    %18 = arith.addf %14, %17 : vector<8x1xf32>
    %19 = math.rsqrt %18 : vector<8x1xf32>
    %20 = vector.broadcast %19 : vector<8x1xf32> to vector<8x32xf32>
    %21 = arith.mulf %16, %20 : vector<8x32xf32>
    %22 = vector.extract_strided_slice %3 {offsets = [1, 0], sizes = [1, 32], strides = [1, 1]} : vector<6x32xf32> to vector<1x32xf32>
    %cst_9 = arith.constant 1.000000e+00 : f32
    %23 = vector.broadcast %cst_9 : f32 to vector<1x32xf32>
    %24 = arith.addf %23, %22 : vector<1x32xf32>
    %25 = vector.broadcast %24 : vector<1x32xf32> to vector<8x32xf32>
    %26 = arith.mulf %21, %25 : vector<8x32xf32>
    %27 = vector.extract_strided_slice %3 {offsets = [0, 0], sizes = [1, 32], strides = [1, 1]} : vector<6x32xf32> to vector<1x32xf32>
    %28 = vector.broadcast %27 : vector<1x32xf32> to vector<8x32xf32>
    %29 = arith.addf %26, %28 : vector<8x32xf32>
    %30 = arith.truncf %29 : vector<8x32xf32> to vector<8x32xbf16>
    %c0_10 = arith.constant 0 : index
    %c0_11 = arith.constant 0 : index
    %31 = vector.load %arg4[%c0_10, %c0_11] : memref<32x32xbf16, #tpu.memory_space<vmem>>, vector<32x32xbf16>
    %cst_12 = arith.constant dense<0.000000e+00> : vector<8x32xf32>
    %32 = tpu.matmul %30, %31, %cst_12 {dimension_numbers = #tpu.dot_dimension_numbers<[1], [0], [0], [1], [0, 0, 1, 1], [], []>} : vector<8x32xbf16>, vector<32x32xbf16>, vector<8x32xf32> -> vector<8x32xf32>
    %c0_13 = arith.constant 0 : index
    %c0_14 = arith.constant 0 : index
    %33 = vector.load %arg5[%c0_13, %c0_14] : memref<1x32xf32, #tpu.memory_space<vmem>>, vector<1x32xf32>
    %34 = vector.broadcast %33 : vector<1x32xf32> to vector<8x32xf32>
    %35 = arith.addf %32, %34 : vector<8x32xf32>
    %36 = arith.truncf %35 : vector<8x32xf32> to vector<8x32xbf16>
    %c0_15 = arith.constant 0 : index
    %c0_16 = arith.constant 0 : index
    %c0_17 = arith.constant 0 : index
    %37 = vector.load %arg10[%c0_15, %c0_16, %c0_17] : memref<1x8x32xbf16, #tpu.memory_space<vmem>>, vector<1x8x32xbf16>
    %38 = vector.shape_cast %37 : vector<1x8x32xbf16> to vector<8x32xbf16>
    %39 = vector.shape_cast %36 : vector<8x32xbf16> to vector<1x8x32xbf16>
    tpu.vector_store %arg10[%c0_15, %c0_16, %c0_17], %39 {strides = array<i32>} : memref<1x8x32xbf16, #tpu.memory_space<vmem>>, vector<1x8x32xbf16>,
    %c0_18 = arith.constant 0 : index
    %c0_19 = arith.constant 0 : index
    %40 = vector.load %arg6[%c0_18, %c0_19] : memref<32x32xbf16, #tpu.memory_space<vmem>>, vector<32x32xbf16>
    %cst_20 = arith.constant dense<0.000000e+00> : vector<8x32xf32>
    %41 = tpu.matmul %30, %40, %cst_20 {dimension_numbers = #tpu.dot_dimension_numbers<[1], [0], [0], [1], [0, 0, 1, 1], [], []>} : vector<8x32xbf16>, vector<32x32xbf16>, vector<8x32xf32> -> vector<8x32xf32>
    %c0_21 = arith.constant 0 : index
    %c0_22 = arith.constant 0 : index
    %42 = vector.load %arg7[%c0_21, %c0_22] : memref<1x32xf32, #tpu.memory_space<vmem>>, vector<1x32xf32>
    %43 = vector.broadcast %42 : vector<1x32xf32> to vector<8x32xf32>
    %44 = arith.addf %41, %43 : vector<8x32xf32>
    %45 = arith.truncf %44 : vector<8x32xf32> to vector<8x32xbf16>
    %c0_23 = arith.constant 0 : index
    %c0_24 = arith.constant 0 : index
    %c0_25 = arith.constant 0 : index
    %46 = vector.load %arg11[%c0_23, %c0_24, %c0_25] : memref<1x8x32xbf16, #tpu.memory_space<vmem>>, vector<1x8x32xbf16>
    %47 = vector.shape_cast %46 : vector<1x8x32xbf16> to vector<8x32xbf16>
    %48 = vector.shape_cast %45 : vector<8x32xbf16> to vector<1x8x32xbf16>
    tpu.vector_store %arg11[%c0_23, %c0_24, %c0_25], %48 {strides = array<i32>} : memref<1x8x32xbf16, #tpu.memory_space<vmem>>, vector<1x8x32xbf16>,
    %c0_26 = arith.constant 0 : index
    %c0_27 = arith.constant 0 : index
    %49 = vector.load %arg8[%c0_26, %c0_27] : memref<32x32xbf16, #tpu.memory_space<vmem>>, vector<32x32xbf16>
    %cst_28 = arith.constant dense<0.000000e+00> : vector<8x32xf32>
    %50 = tpu.matmul %30, %49, %cst_28 {dimension_numbers = #tpu.dot_dimension_numbers<[1], [0], [0], [1], [0, 0, 1, 1], [], []>} : vector<8x32xbf16>, vector<32x32xbf16>, vector<8x32xf32> -> vector<8x32xf32>
    %c0_29 = arith.constant 0 : index
    %c0_30 = arith.constant 0 : index
    %51 = vector.load %arg9[%c0_29, %c0_30] : memref<1x32xf32, #tpu.memory_space<vmem>>, vector<1x32xf32>
    %52 = vector.broadcast %51 : vector<1x32xf32> to vector<8x32xf32>
    %53 = arith.addf %50, %52 : vector<8x32xf32>
    %54 = arith.truncf %53 : vector<8x32xf32> to vector<8x32xbf16>
    %c0_31 = arith.constant 0 : index
    %c0_32 = arith.constant 0 : index
    %c0_33 = arith.constant 0 : index
    %55 = vector.load %arg12[%c0_31, %c0_32, %c0_33] : memref<1x8x32xbf16, #tpu.memory_space<vmem>>, vector<1x8x32xbf16>
    %56 = vector.shape_cast %55 : vector<1x8x32xbf16> to vector<8x32xbf16>
    %57 = vector.shape_cast %54 : vector<8x32xbf16> to vector<1x8x32xbf16>
    tpu.vector_store %arg12[%c0_31, %c0_32, %c0_33], %57 {strides = array<i32>} : memref<1x8x32xbf16, #tpu.memory_space<vmem>>, vector<1x8x32xbf16>,
    return
  }
  func.func @transform_0(%arg0: i32, %arg1: i32) -> (i32, i32, i32) {
    %c0_i32 = arith.constant 0 : i32
    %c0_i32_0 = arith.constant 0 : i32
    return %arg0, %arg1, %c0_i32 : i32, i32, i32
  }
  func.func @transform_1(%arg0: i32, %arg1: i32) -> (i32, i32, i32) {
    %c0_i32 = arith.constant 0 : i32
    %c0_i32_0 = arith.constant 0 : i32
    %c0_i32_1 = arith.constant 0 : i32
    return %arg0, %c0_i32, %c0_i32_0 : i32, i32, i32
  }
  func.func @transform_2(%arg0: i32, %arg1: i32) -> (i32, i32) {
    %c0_i32 = arith.constant 0 : i32
    %c0_i32_0 = arith.constant 0 : i32
    %c0_i32_1 = arith.constant 0 : i32
    return %c0_i32, %c0_i32_0 : i32, i32
  }
  func.func @transform_3(%arg0: i32, %arg1: i32) -> (i32, i32) {
    %c0_i32 = arith.constant 0 : i32
    %c0_i32_0 = arith.constant 0 : i32
    %c0_i32_1 = arith.constant 0 : i32
    return %c0_i32, %c0_i32_0 : i32, i32
  }
  func.func @transform_4(%arg0: i32, %arg1: i32) -> (i32, i32) {
    %c0_i32 = arith.constant 0 : i32
    %c0_i32_0 = arith.constant 0 : i32
    %c0_i32_1 = arith.constant 0 : i32
    return %c0_i32, %c0_i32_0 : i32, i32
  }
  func.func @transform_5(%arg0: i32, %arg1: i32) -> (i32, i32) {
    %c0_i32 = arith.constant 0 : i32
    %c0_i32_0 = arith.constant 0 : i32
    %c0_i32_1 = arith.constant 0 : i32
    return %c0_i32, %c0_i32_0 : i32, i32
  }
  func.func @transform_6(%arg0: i32, %arg1: i32) -> (i32, i32) {
    %c0_i32 = arith.constant 0 : i32
    %c0_i32_0 = arith.constant 0 : i32
    %c0_i32_1 = arith.constant 0 : i32
    return %c0_i32, %c0_i32_0 : i32, i32
  }
  func.func @transform_7(%arg0: i32, %arg1: i32) -> (i32, i32) {
    %c0_i32 = arith.constant 0 : i32
    %c0_i32_0 = arith.constant 0 : i32
    %c0_i32_1 = arith.constant 0 : i32
    return %c0_i32, %c0_i32_0 : i32, i32
  }
  func.func @transform_8(%arg0: i32, %arg1: i32) -> (i32, i32, i32) {
    %c0_i32 = arith.constant 0 : i32
    %c0_i32_0 = arith.constant 0 : i32
    return %arg0, %arg1, %c0_i32 : i32, i32, i32
  }
  func.func @transform_9(%arg0: i32, %arg1: i32) -> (i32, i32, i32) {
    %c0_i32 = arith.constant 0 : i32
    %c0_i32_0 = arith.constant 0 : i32
    return %arg0, %arg1, %c0_i32 : i32, i32, i32
  }
  func.func @transform_10(%arg0: i32, %arg1: i32) -> (i32, i32, i32) {
    %c0_i32 = arith.constant 0 : i32
    %c0_i32_0 = arith.constant 0 : i32
    return %arg0, %arg1, %c0_i32 : i32, i32, i32
  }
}

</mosaic_0001>

<llo_original>
// kernel: tpu_custom_call.1
$region0: #{tpu_custom_call.1}
  #allocation0 [shape = 'u32[]', space=smem, size = 0x4, offset = 0x4, fixed_abs, tag = 'smem constant byte address 0x4 - core index']
  #allocation1 [shape = 'u32[144,128]{1,0:T(1,128)}', space=vmem, size = 0x12000, scoped, tag = 'internal scratch']
  %s0 = inlined_call_operand.vmem [shape: f32[2,8,32], index: 0, kind: input, shape index: {}]
  %s1 = inlined_call_operand.vmem [shape: f32[2,6,32], index: 1, kind: input, shape index: {}]
  %s2 = inlined_call_operand.vmem [shape: bf16[32,32], index: 2, kind: input, shape index: {}]
  %s3 = inlined_call_operand.vmem [shape: f32[1,32], index: 3, kind: input, shape index: {}]
  %s4 = inlined_call_operand.hbm [shape: bf16[32,32], index: 4, kind: input, shape index: {}]
  %s5 = inlined_call_operand.vmem [shape: f32[1,32], index: 5, kind: input, shape index: {}]
  %s6 = inlined_call_operand.vmem [shape: bf16[32,32], index: 6, kind: input, shape index: {}]
  %s7 = inlined_call_operand.vmem [shape: f32[1,32], index: 7, kind: input, shape index: {}]
  %s8 = inlined_call_operand.hbm [shape: bf16[2,8,32], index: 8, kind: output, shape index: {0}]
  %s9 = inlined_call_operand.hbm [shape: bf16[2,8,32], index: 9, kind: output, shape index: {1}]
  %s10 = inlined_call_operand.hbm [shape: bf16[2,8,32], index: 10, kind: output, shape index: {2}]
  %11 = xla_tuple %s8, %s9, %s10
  %s12 = sld [smem:[#allocation0]]
  $region85: #{tpu_custom_call.1} parent=0
    _
  %s14 = ssub.s32 1, %s12
  %s15 = scalar_select 0, %s14, %s12
  $region1: #{tpu_custom_call.1} parent=0
    #allocation2 [shape = 'u8[8192]{0}', space=vmem, size = 0x2000, scoped, tag = 'input window, operand 4, single buffered']
    #allocation3 [shape = 's32[2]{0}', space=sflag, size = 0x8, scoped, tag = 'scoped memory for tpu_custom_call.1']
    #allocation4 [shape = 's32[2]{0}', space=sflag, size = 0x8, scoped, tag = 'scoped memory for tpu_custom_call.1']
    #allocation5 [shape = 'u8[4096]{0}', space=vmem, size = 0x1000, scoped, tag = 'output window, operand 0']
    #allocation6 [shape = 'u8[4096]{0}', space=vmem, size = 0x1000, scoped, tag = 'output window, operand 1']
    #allocation7 [shape = 's32[2]{0}', space=sflag, size = 0x8, scoped, tag = 'scoped memory for tpu_custom_call.1']
    #allocation8 [shape = 'u8[4096]{0}', space=vmem, size = 0x1000, scoped, tag = 'output window, operand 2']
    %16 = vsyncpa [#allocation3], 0
    %17 = vsyncpa [#allocation4], 0
    %s18 = scalar_lea.sflag [#allocation4], 1
    %19 = vsyncpa %s18, 0
    %20 = vsyncpa [#allocation7], 0
    %s21 = scalar_lea.sflag [#allocation7], 1
    %22 = vsyncpa %s21, 0
    loop: start=0, step=1, limit=4
    $region2: #{tpu_custom_call.1} parent=1 // loop_pre_header
      _
    $region3: #{tpu_custom_call.1} parent=1 // loop_header
      %s24 = sphi 0, %s28
      %p25 = scmp.ge.s32.totalorder %s24, 4
      %s31 = sphi 0, %s43
      %s32 = sphi 0, %s39
      %s33 = sphi 0, %s31
      %s34 = sphi 0, %s32
      %s35 = sphi 0, %s33
      %s36 = sphi 0, %s34
      %s48 = sphi 0, %s50
      %s51 = sphi 0, %s48
      %s52 = sphi 0, %s51
      %s68 = sphi 0, %s52
      %s74 = sphi 0, %s76
      %s77 = sphi 0, %s74
      %s78 = sphi 0, %s77
      %s94 = sphi 0, %s78
      %s98 = sphi 0, %s98
      %s100 = sphi 0, %s98
      %s101 = sphi 0, %s100
      %s115 = sphi 0, %s101
      %s119 = sphi 0, %s119
      %s121 = sphi 0, %s119
      %s122 = sphi 0, %s121
      %s136 = sphi 0, %s122
      %s140 = sphi 0, %s140
      %s142 = sphi 0, %s140
      %s143 = sphi 0, %s142
      %s157 = sphi 0, %s143
      %s161 = sphi 0, %s161
      %s163 = sphi 0, %s161
      %s164 = sphi 0, %s163
      %s178 = sphi 0, %s164
      %s182 = sphi 0, %s182
      %s184 = sphi 0, %s182
      %s185 = sphi 0, %s184
      %s199 = sphi 0, %s185
      %s203 = sphi 0, %s203
      %s205 = sphi 0, %s203
      %s206 = sphi 0, %s205
      %s220 = sphi 0, %s206
      %s228 = sphi 0, %s230
      %s231 = sphi 0, %s228
      %s232 = sphi 0, %s231
      %s248 = sphi 0, %s232
      %s256 = sphi 0, %s258
      %s259 = sphi 0, %s256
      %s260 = sphi 0, %s259
      %s276 = sphi 0, %s260
      %s284 = sphi 0, %s286
      %s287 = sphi 0, %s284
      %s288 = sphi 0, %s287
      %s304 = sphi 0, %s288
    $region4: #{tpu_custom_call.1} parent=1 // loop_header_branch
      %27 = sbr.rel (%p25) target = $region8
    $region5: #{tpu_custom_call.1} parent=1 // loop_body
      %s29 = ssub.s32 %s24, 1
      %s30 = ssub.s32 %s24, 2
      %s37 = sadd.s32 1, %s32
      %p38 = scmp.ge.s32.totalorder %s37, 1
      %s39 = scalar_select %p38, 0, %s37
      %s40 = sadd.s32 1, %s31
      %s41 = scalar_select %p38, %s40, %s31
      %p42 = scmp.ge.s32.totalorder %s41, 2
      %s43 = scalar_select %p42, 0, %s41
      %s44 = ssub.s32 %s31, %s43
      %s45 = ssub.s32 %s32, %s39
      %s46 = sor.u32 %s44, %s45
      %p47 = scmp.eq.s32.totalorder %s46, 0
      %s49 = sadd.s32 %s48, 1
      %s50 = scalar_select %p47, %s48, %s49
      %p53 = pneg %p47
      %p54 = scmp.eq.s32.totalorder %s24, 1
      %p55 = por %p53, %p54
      %p56 = scmp.ne.s32.totalorder %s48, %s51
      %p57 = scmp.eq.s32.totalorder %s24, 0
      %p58 = por %p56, %p57
      %p59 = scmp.ne.s32.totalorder %s48, %s51
      %p60 = scmp.eq.s32.totalorder %s29, 1
      %p61 = por %p59, %p60
      %p62 = scmp.ne.s32.totalorder %s51, %s52
      %p63 = scmp.eq.s32.totalorder %s29, 0
      %p64 = por %p62, %p63
      %p65 = scmp.ne.s32.totalorder %s51, %s52
      %p66 = scmp.eq.s32.totalorder %s30, 1
      %p67 = por %p65, %p66
      %p69 = scmp.ne.s32.totalorder %s52, %s68
      %p70 = scmp.eq.s32.totalorder %s30, 0
      %p71 = por %p69, %p70
      %s72 = ssub.s32 %s31, %s43
      %p73 = scmp.eq.s32.totalorder %s72, 0
      %s75 = sadd.s32 %s74, 1
      %s76 = scalar_select %p73, %s74, %s75
      %p79 = pneg %p73
      %p80 = scmp.eq.s32.totalorder %s24, 1
      %p81 = por %p79, %p80
      %p82 = scmp.ne.s32.totalorder %s74, %s77
      %p83 = scmp.eq.s32.totalorder %s24, 0
      %p84 = por %p82, %p83
      %p85 = scmp.ne.s32.totalorder %s74, %s77
      %p86 = scmp.eq.s32.totalorder %s29, 1
      %p87 = por %p85, %p86
      %p88 = scmp.ne.s32.totalorder %s77, %s78
      %p89 = scmp.eq.s32.totalorder %s29, 0
      %p90 = por %p88, %p89
      %p91 = scmp.ne.s32.totalorder %s77, %s78
      %p92 = scmp.eq.s32.totalorder %s30, 1
      %p93 = por %p91, %p92
      %p95 = scmp.ne.s32.totalorder %s78, %s94
      %p96 = scmp.eq.s32.totalorder %s30, 0
      %p97 = por %p95, %p96
      %s99 = sadd.s32 %s98, 1
      %p102 = scmp.eq.s32.totalorder %s24, 1
      %p103 = scmp.ne.s32.totalorder %s98, %s100
      %p104 = scmp.eq.s32.totalorder %s24, 0
      %p105 = por %p103, %p104
      %p106 = scmp.ne.s32.totalorder %s98, %s100
      %p107 = scmp.eq.s32.totalorder %s29, 1
      %p108 = por %p106, %p107
      %p109 = scmp.ne.s32.totalorder %s100, %s101
      %p110 = scmp.eq.s32.totalorder %s29, 0
      %p111 = por %p109, %p110
      %p112 = scmp.ne.s32.totalorder %s100, %s101
      %p113 = scmp.eq.s32.totalorder %s30, 1
      %p114 = por %p112, %p113
      %p116 = scmp.ne.s32.totalorder %s101, %s115
      %p117 = scmp.eq.s32.totalorder %s30, 0
      %p118 = por %p116, %p117
      %s120 = sadd.s32 %s119, 1
      %p123 = scmp.eq.s32.totalorder %s24, 1
      %p124 = scmp.ne.s32.totalorder %s119, %s121
      %p125 = scmp.eq.s32.totalorder %s24, 0
      %p126 = por %p124, %p125
      %p127 = scmp.ne.s32.totalorder %s119, %s121
      %p128 = scmp.eq.s32.totalorder %s29, 1
      %p129 = por %p127, %p128
      %p130 = scmp.ne.s32.totalorder %s121, %s122
      %p131 = scmp.eq.s32.totalorder %s29, 0
      %p132 = por %p130, %p131
      %p133 = scmp.ne.s32.totalorder %s121, %s122
      %p134 = scmp.eq.s32.totalorder %s30, 1
      %p135 = por %p133, %p134
      %p137 = scmp.ne.s32.totalorder %s122, %s136
      %p138 = scmp.eq.s32.totalorder %s30, 0
      %p139 = por %p137, %p138
      %s141 = sadd.s32 %s140, 1
      %p144 = scmp.eq.s32.totalorder %s24, 1
      %p145 = scmp.ne.s32.totalorder %s140, %s142
      %p146 = scmp.eq.s32.totalorder %s24, 0
      %p147 = por %p145, %p146
      %p148 = scmp.ne.s32.totalorder %s140, %s142
      %p149 = scmp.eq.s32.totalorder %s29, 1
      %p150 = por %p148, %p149
      %p151 = scmp.ne.s32.totalorder %s142, %s143
      %p152 = scmp.eq.s32.totalorder %s29, 0
      %p153 = por %p151, %p152
      %p154 = scmp.ne.s32.totalorder %s142, %s143
      %p155 = scmp.eq.s32.totalorder %s30, 1
      %p156 = por %p154, %p155
      %p158 = scmp.ne.s32.totalorder %s143, %s157
      %p159 = scmp.eq.s32.totalorder %s30, 0
      %p160 = por %p158, %p159
      %s162 = sadd.s32 %s161, 1
      %p165 = scmp.eq.s32.totalorder %s24, 1
      %p166 = scmp.ne.s32.totalorder %s161, %s163
      %p167 = scmp.eq.s32.totalorder %s24, 0
      %p168 = por %p166, %p167
      %p169 = scmp.ne.s32.totalorder %s161, %s163
      %p170 = scmp.eq.s32.totalorder %s29, 1
      %p171 = por %p169, %p170
      %p172 = scmp.ne.s32.totalorder %s163, %s164
      %p173 = scmp.eq.s32.totalorder %s29, 0
      %p174 = por %p172, %p173
      %p175 = scmp.ne.s32.totalorder %s163, %s164
      %p176 = scmp.eq.s32.totalorder %s30, 1
      %p177 = por %p175, %p176
      %p179 = scmp.ne.s32.totalorder %s164, %s178
      %p180 = scmp.eq.s32.totalorder %s30, 0
      %p181 = por %p179, %p180
      %s183 = sadd.s32 %s182, 1
      %p186 = scmp.eq.s32.totalorder %s24, 1
      %p187 = scmp.ne.s32.totalorder %s182, %s184
      %p188 = scmp.eq.s32.totalorder %s24, 0
      %p189 = por %p187, %p188
      %p190 = scmp.ne.s32.totalorder %s182, %s184
      %p191 = scmp.eq.s32.totalorder %s29, 1
      %p192 = por %p190, %p191
      %p193 = scmp.ne.s32.totalorder %s184, %s185
      %p194 = scmp.eq.s32.totalorder %s29, 0
      %p195 = por %p193, %p194
      %p196 = scmp.ne.s32.totalorder %s184, %s185
      %p197 = scmp.eq.s32.totalorder %s30, 1
      %p198 = por %p196, %p197
      %p200 = scmp.ne.s32.totalorder %s185, %s199
      %p201 = scmp.eq.s32.totalorder %s30, 0
      %p202 = por %p200, %p201
      %s204 = sadd.s32 %s203, 1
      %p207 = scmp.eq.s32.totalorder %s24, 1
      %p208 = scmp.ne.s32.totalorder %s203, %s205
      %p209 = scmp.eq.s32.totalorder %s24, 0
      %p210 = por %p208, %p209
      %p211 = scmp.ne.s32.totalorder %s203, %s205
      %p212 = scmp.eq.s32.totalorder %s29, 1
      %p213 = por %p211, %p212
      %p214 = scmp.ne.s32.totalorder %s205, %s206
      %p215 = scmp.eq.s32.totalorder %s29, 0
      %p216 = por %p214, %p215
      %p217 = scmp.ne.s32.totalorder %s205, %s206
      %p218 = scmp.eq.s32.totalorder %s30, 1
      %p219 = por %p217, %p218
      %p221 = scmp.ne.s32.totalorder %s206, %s220
      %p222 = scmp.eq.s32.totalorder %s30, 0
      %p223 = por %p221, %p222
      %s224 = ssub.s32 %s31, %s43
      %s225 = ssub.s32 %s32, %s39
      %s226 = sor.u32 %s224, %s225
      %p227 = scmp.eq.s32.totalorder %s226, 0
      %s229 = sadd.s32 %s228, 1
      %s230 = scalar_select %p227, %s228, %s229
      %p233 = pneg %p227
      %p234 = scmp.eq.s32.totalorder %s24, 1
      %p235 = por %p233, %p234
      %p236 = scmp.ne.s32.totalorder %s228, %s231
      %p237 = scmp.eq.s32.totalorder %s24, 0
      %p238 = por %p236, %p237
      %p239 = scmp.ne.s32.totalorder %s228, %s231
      %p240 = scmp.eq.s32.totalorder %s29, 1
      %p241 = por %p239, %p240
      %p242 = scmp.ne.s32.totalorder %s231, %s232
      %p243 = scmp.eq.s32.totalorder %s29, 0
      %p244 = por %p242, %p243
      %p245 = scmp.ne.s32.totalorder %s231, %s232
      %p246 = scmp.eq.s32.totalorder %s30, 1
      %p247 = por %p245, %p246
      %p249 = scmp.ne.s32.totalorder %s232, %s248
      %p250 = scmp.eq.s32.totalorder %s30, 0
      %p251 = por %p249, %p250
      %s252 = ssub.s32 %s31, %s43
      %s253 = ssub.s32 %s32, %s39
      %s254 = sor.u32 %s252, %s253
      %p255 = scmp.eq.s32.totalorder %s254, 0
      %s257 = sadd.s32 %s256, 1
      %s258 = scalar_select %p255, %s256, %s257
      %p261 = pneg %p255
      %p262 = scmp.eq.s32.totalorder %s24, 1
      %p263 = por %p261, %p262
      %p264 = scmp.ne.s32.totalorder %s256, %s259
      %p265 = scmp.eq.s32.totalorder %s24, 0
      %p266 = por %p264, %p265
      %p267 = scmp.ne.s32.totalorder %s256, %s259
      %p268 = scmp.eq.s32.totalorder %s29, 1
      %p269 = por %p267, %p268
      %p270 = scmp.ne.s32.totalorder %s259, %s260
      %p271 = scmp.eq.s32.totalorder %s29, 0
      %p272 = por %p270, %p271
      %p273 = scmp.ne.s32.totalorder %s259, %s260
      %p274 = scmp.eq.s32.totalorder %s30, 1
      %p275 = por %p273, %p274
      %p277 = scmp.ne.s32.totalorder %s260, %s276
      %p278 = scmp.eq.s32.totalorder %s30, 0
      %p279 = por %p277, %p278
      %s280 = ssub.s32 %s31, %s43
      %s281 = ssub.s32 %s32, %s39
      %s282 = sor.u32 %s280, %s281
      %p283 = scmp.eq.s32.totalorder %s282, 0
      %s285 = sadd.s32 %s284, 1
      %s286 = scalar_select %p283, %s284, %s285
      %p289 = pneg %p283
      %p290 = scmp.eq.s32.totalorder %s24, 1
      %p291 = por %p289, %p290
      %p292 = scmp.ne.s32.totalorder %s284, %s287
      %p293 = scmp.eq.s32.totalorder %s24, 0
      %p294 = por %p292, %p293
      %p295 = scmp.ne.s32.totalorder %s284, %s287
      %p296 = scmp.eq.s32.totalorder %s29, 1
      %p297 = por %p295, %p296
      %p298 = scmp.ne.s32.totalorder %s287, %s288
      %p299 = scmp.eq.s32.totalorder %s29, 0
      %p300 = por %p298, %p299
      %p301 = scmp.ne.s32.totalorder %s287, %s288
      %p302 = scmp.eq.s32.totalorder %s30, 1
      %p303 = por %p301, %p302
      %p305 = scmp.ne.s32.totalorder %s288, %s304
      %p306 = scmp.eq.s32.totalorder %s30, 0
      %p307 = por %p305, %p306
      %p308 = scmp.le.s32.totalorder 1, %s24
      %p309 = scmp.lt.s32.totalorder %s24, 3
      %p310 = pnand %p308, %p309
      %p311 = pneg %p310
      // Predicated region
      $region9: #{tpu_custom_call.1} parent=5 // pred_check
        _
      $region10: #{tpu_custom_call.1} parent=5 // pred_check_branch
        %313 = sbr.rel (%p310) target = $region12
      $region11: #{tpu_custom_call.1} parent=5 // pred_region
        %s314 = ssub.s32 %s24, 1
        // Predicated region
        $region13: #{tpu_custom_call.1} parent=11 // pred_check
          %p315 = pneg %p111
        $region14: #{tpu_custom_call.1} parent=11 // pred_check_branch
          %317 = sbr.rel (%p315) target = $region16
        $region15: #{tpu_custom_call.1} parent=11 // pred_region
          _
        $region16: #{tpu_custom_call.1} parent=11 // pred_fallthru
          _
        // Predicated region
        $region17: #{tpu_custom_call.1} parent=11 // pred_check
          %p318 = pneg %p132
        $region18: #{tpu_custom_call.1} parent=11 // pred_check_branch
          %320 = sbr.rel (%p318) target = $region20
        $region19: #{tpu_custom_call.1} parent=11 // pred_region
          _
        $region20: #{tpu_custom_call.1} parent=11 // pred_fallthru
          _
        // Predicated region
        $region21: #{tpu_custom_call.1} parent=11 // pred_check
          %p321 = pneg %p153
        $region22: #{tpu_custom_call.1} parent=11 // pred_check_branch
          %323 = sbr.rel (%p321) target = $region24
        $region23: #{tpu_custom_call.1} parent=11 // pred_region
          %s325 = ssub.s32 256, 256
          %326 = vsyncadd [#allocation3], %s325
          %s327 = sshll.u32 [#allocation2], 4
          %s328 = int_to_ptr.vmem [resolvable:$true] %s327
          %333 = dma.hbm_to_vmem [thread:$0]  %s4, 256, %s328, [#allocation3], 64, 64, 4
        $region24: #{tpu_custom_call.1} parent=11 // pred_fallthru
          _
        // Predicated region
        $region25: #{tpu_custom_call.1} parent=11 // pred_check
          %p334 = pneg %p174
        $region26: #{tpu_custom_call.1} parent=11 // pred_check_branch
          %336 = sbr.rel (%p334) target = $region28
        $region27: #{tpu_custom_call.1} parent=11 // pred_region
          _
        $region28: #{tpu_custom_call.1} parent=11 // pred_fallthru
          _
        // Predicated region
        $region29: #{tpu_custom_call.1} parent=11 // pred_check
          %p337 = pneg %p195
        $region30: #{tpu_custom_call.1} parent=11 // pred_check_branch
          %339 = sbr.rel (%p337) target = $region32
        $region31: #{tpu_custom_call.1} parent=11 // pred_region
          _
        $region32: #{tpu_custom_call.1} parent=11 // pred_fallthru
          _
        // Predicated region
        $region33: #{tpu_custom_call.1} parent=11 // pred_check
          %p340 = pneg %p216
        $region34: #{tpu_custom_call.1} parent=11 // pred_check_branch
          %342 = sbr.rel (%p340) target = $region36
        $region35: #{tpu_custom_call.1} parent=11 // pred_region
          _
        $region36: #{tpu_custom_call.1} parent=11 // pred_fallthru
          _
      $region12: #{tpu_custom_call.1} parent=5 // pred_fallthru
        _
      %p343 = scmp.lt.s32.totalorder %s24, 2
      // Predicated region
      $region37: #{tpu_custom_call.1} parent=5 // pred_check
        %p344 = pneg %p343
      $region38: #{tpu_custom_call.1} parent=5 // pred_check_branch
        %346 = sbr.rel (%p344) target = $region40
      $region39: #{tpu_custom_call.1} parent=5 // pred_region
        // Predicated region
        $region41: #{tpu_custom_call.1} parent=39 // pred_check
          %p347 = pneg %p58
        $region42: #{tpu_custom_call.1} parent=39 // pred_check_branch
          %349 = sbr.rel (%p347) target = $region44
        $region43: #{tpu_custom_call.1} parent=39 // pred_region
          %p350 = scmp.lt.s32.totalorder %s31, 1
          %s351 = scalar_select %p350, %s31, 1
          %p352 = scmp.lt.s32.totalorder %s32, 0
          %s353 = scalar_select %p352, %s32, 0
          %s354 = sadd.s32 %s353, %s351
          %s355 = smul.addr %s354, 8
          %s356 = scalar_lea.vmem %s0, %s355
        $region44: #{tpu_custom_call.1} parent=39 // pred_fallthru
          _
        // Predicated region
        $region45: #{tpu_custom_call.1} parent=39 // pred_check
          %p357 = pneg %p84
        $region46: #{tpu_custom_call.1} parent=39 // pred_check_branch
          %359 = sbr.rel (%p357) target = $region48
        $region47: #{tpu_custom_call.1} parent=39 // pred_region
          %p360 = scmp.lt.s32.totalorder %s31, 1
          %s361 = scalar_select %p360, %s31, 1
          %s362 = smul.addr %s361, 8
          %s363 = scalar_lea.vmem %s1, %s362
        $region48: #{tpu_custom_call.1} parent=39 // pred_fallthru
          _
      $region40: #{tpu_custom_call.1} parent=5 // pred_fallthru
        _
      %p364 = scmp.le.s32.totalorder 1, %s24
      %p365 = scmp.lt.s32.totalorder %s24, 3
      %p366 = pnand %p364, %p365
      %p367 = pneg %p366
      // Predicated region
      $region49: #{tpu_custom_call.1} parent=5 // pred_check
        _
      $region50: #{tpu_custom_call.1} parent=5 // pred_check_branch
        %369 = sbr.rel (%p366) target = $region52
      $region51: #{tpu_custom_call.1} parent=5 // pred_region
        %s370 = ssub.s32 %s24, 1
        // Predicated region
        $region53: #{tpu_custom_call.1} parent=51 // pred_check
          %p371 = pneg %p153
        $region54: #{tpu_custom_call.1} parent=51 // pred_check_branch
          %373 = sbr.rel (%p371) target = $region56
        $region55: #{tpu_custom_call.1} parent=51 // pred_region
          %374 = dma.done [#allocation3], 256
        $region56: #{tpu_custom_call.1} parent=51 // pred_fallthru
          _
        %p375 = scmp.lt.s32.totalorder %s33, 1
        %s376 = scalar_select %p375, %s33, 1
        %p377 = scmp.lt.s32.totalorder %s34, 0
        %s378 = scalar_select %p377, %s34, 0
        %s379 = sadd.s32 %s378, %s376
        %s380 = smul.addr %s379, 8
        %s381 = scalar_lea.vmem %s0, %s380
        %p382 = pneg %p64
        %p383 = pneg %p61
        %p384 = scmp.lt.s32.totalorder %s33, 1
        %s385 = scalar_select %p384, %s33, 1
        %s386 = smul.addr %s385, 8
        %s387 = scalar_lea.vmem %s1, %s386
        %p388 = pneg %p90
        %p389 = pneg %p87
        %p390 = pneg %p111
        %p391 = pneg %p108
        %p392 = pneg %p132
        %p393 = pneg %p129
        %p394 = pneg %p153
        %p395 = pneg %p150
        %p396 = pneg %p174
        %p397 = pneg %p171
        %p398 = pneg %p195
        %p399 = pneg %p192
        %p400 = pneg %p216
        %p401 = pneg %p213
        %p402 = pneg %p244
        %p403 = pneg %p241
        %s404 = sand.u32 %s231, 1
        %s405 = scalar_lea.sflag [#allocation4], %s404
        %s406 = sand.u32 %s231, 1
        %s407 = smul.addr %s406, 4
        %s408 = scalar_lea.vmem [#allocation5], %s407
        %p409 = pneg %p272
        %p410 = pneg %p269
        %s411 = sand.u32 %s29, 1
        %s412 = scalar_lea.sflag [#allocation7], %s411
        %s413 = sand.u32 %s259, 1
        %s414 = smul.addr %s413, 4
        %s415 = scalar_lea.vmem [#allocation6], %s414
        %p416 = pneg %p300
        %p417 = pneg %p297
        %s418 = sand.u32 %s29, 1
        %s419 = scalar_lea.sflag [#allocation7], %s418
        %s420 = sand.u32 %s287, 1
        %s421 = smul.addr %s420, 4
        %s422 = scalar_lea.vmem [#allocation8], %s421
        %p423 = scmp.lt.s32.totalorder %s33, 1
        %s424 = scalar_select %p423, %s33, 1
        %p425 = scmp.lt.s32.totalorder %s34, 0
        %s426 = scalar_select %p425, %s34, 0
        %s427 = sadd.s32 %s426, %s424
        %s428 = smul.addr %s427, 8
        %s429 = scalar_lea.vmem %s0, %s428
        %p430 = scmp.lt.s32.totalorder %s33, 1
        %s431 = scalar_select %p430, %s33, 1
        %s432 = smul.addr %s431, 8
        %s433 = scalar_lea.vmem %s1, %s432
        %v435 = vld [vmem:[%s429] sm:$0xff]
        %v436 = vld [vmem:[%s433] sm:$0x3f]
        %vm437 = vcmask 261120
        %v438 = vsel %vm437, %v435, 0.0
        %439 = vadd.xlane.f32.xlu0 %v438
        %v440 = vpop.xlane.xlu0 %439
        %v441 = vrcp.pop 32.0
        %v442 = vmul.f32 %v440, %v441
        %v443 = vsub.f32 %v435, %v442
        %v444 = vmul.f32 %v443, %v443
        %v445 = vsel %vm437, %v444, 0.0
        %446 = vadd.xlane.f32.xlu0 %v445
        %v447 = vpop.xlane.xlu0 %446
        %v448 = vmul.f32 %v447, %v441
        %v449 = vadd.f32 %v448, 1e-06
        %v450 = vrsqrt.pop %v449
        %v451 = vmul.f32 %v443, %v450
        %v452 = vadd.f32 %v436, 1.0
        %v453 = vlaneseq
        %v454 = vshrl.u32 %v453, 7
        %v455 = vsub.s32 1, %v454
        %v456 = vrot.slane %v452, %v455
        %v457 = vmul.f32 %v451, %v456
        %v458 = vlaneseq
        %v459 = vshrl.u32 %v458, 7
        %v460 = vsub.s32 0, %v459
        %v461 = vrot.slane %v436, %v460
        %v462 = vadd.f32 %v457, %v461
        %v463 = vpack.c.bf16 %v462, %v462
        %v464 = vld [vmem:[%s2] sm:$0xf]
        %v465 = vld [vmem:[%s2 + $0x4] sm:$0xf]
        %v466 = vld [vmem:[%s2 + $0x8] sm:$0xf]
        %v467 = vld [vmem:[%s2 + $0xc] sm:$0xf]
        %v468 = vld [vmem:[%s3] sm:$0x1]
        %v470 = vlaneseq
        %v471 = vshrl.u32 %v470, 7
        %v472 = vsub.s32 0, %v471
        %v473 = vrot.slane %v468, %v472
        %v479 = vunpack.c.l.b16 %v464
        %v480 = vunpack.c.l.b16 %v465
        %v481 = vunpack.c.l.b16 %v466
        %v482 = vunpack.c.l.b16 %v467
        %v483 = vpack.c.b16 %v480, %v479
        %v484 = vpack.c.b16 %v482, %v481
        %v488 = vsel %vm437, %v463, 0
        %490 = vmatprep.subr.bf16.mxu0 0
        %491 = vmatpush1.bf16.msra.mxu0 %v483
        %492 = vmatprep.subr.bf16.mxu0 0
        %493 = vmatpush1.bf16.msra.mxu0 %v484
        %494 = vmatprep.subr.bf16.mxu0 0
        %495 = vmatpush1.bf16.msra.mxu0 0
        %496 = vmatprep.subr.bf16.mxu0 0
        %497 = vmatpush1.bf16.msra.mxu0 0
        %498 = vmatprep.subr.bf16.mxu0 0
        %499 = vmatpush1.bf16.msra.mxu0 0
        %500 = vmatprep.subr.bf16.mxu0 0
        %501 = vmatpush1.bf16.msra.mxu0 0
        %502 = vmatprep.subr.bf16.mxu0 0
        %503 = vmatpush1.bf16.msra.mxu0 0
        %504 = vmatprep.subr.bf16.mxu0 0
        %505 = vmatpush1.bf16.msra.mxu0 0
        %506 = vmatprep.subr.bf16.mxu0 0
        %507 = vmatpush1.bf16.msra.mxu0 0
        %508 = vmatprep.subr.bf16.mxu0 0
        %509 = vmatpush1.bf16.msra.mxu0 0
        %510 = vmatprep.subr.bf16.mxu0 0
        %511 = vmatpush1.bf16.msra.mxu0 0
        %512 = vmatprep.subr.bf16.mxu0 0
        %513 = vmatpush1.bf16.msra.mxu0 0
        %514 = vmatprep.subr.bf16.mxu0 0
        %515 = vmatpush1.bf16.msra.mxu0 0
        %516 = vmatprep.subr.bf16.mxu0 0
        %517 = vmatpush1.bf16.msra.mxu0 0
        %518 = vmatprep.subr.bf16.mxu0 0
        %519 = vmatpush1.bf16.msra.mxu0 0
        %520 = vmatprep.subr.bf16.mxu0 0
        %521 = vmatpush1.bf16.msra.mxu0 0
        %522 = vmatprep.mubr.bf16.mxu0 0
        %523 = vmatmul.mubr.bf16.gmra.mrb[0].mxu0 %v488
        %v524 = vpop.f32.mrb[0].mxu0
        %v525 = vadd.f32 %v473, %v524
        %v526 = vpop.f32.mrb[0].mxu0
        %v527 = vpop.f32.mrb[0].mxu0
        %v528 = vpop.f32.mrb[0].mxu0
        %529 = vdwg.mxu0
        %v530 = vpack.c.bf16 %v525, %v525
        %vm531 = vcmask 257024
        %532 = vst.msk [vmem:[%s408] sm:$0xf] %vm531, %v530
        %v533 = vld [vmem:[#allocation2] sm:$0xf]
        %v534 = vld [vmem:[#allocation2 + $0x4] sm:$0xf]
        %v535 = vld [vmem:[#allocation2 + $0x8] sm:$0xf]
        %v536 = vld [vmem:[#allocation2 + $0xc] sm:$0xf]
        %v537 = vld [vmem:[%s5] sm:$0x1]
        %v539 = vlaneseq
        %v540 = vshrl.u32 %v539, 7
        %v541 = vsub.s32 0, %v540
        %v542 = vrot.slane %v537, %v541
        %v548 = vunpack.c.l.b16 %v533
        %v549 = vunpack.c.l.b16 %v534
        %v550 = vunpack.c.l.b16 %v535
        %v551 = vunpack.c.l.b16 %v536
        %v552 = vpack.c.b16 %v549, %v548
        %v553 = vpack.c.b16 %v551, %v550
        %556 = vmatprep.subr.bf16.mxu0 0
        %557 = vmatpush1.bf16.msra.mxu0 %v552
        %558 = vmatprep.subr.bf16.mxu0 0
        %559 = vmatpush1.bf16.msra.mxu0 %v553
        %560 = vmatprep.subr.bf16.mxu0 0
        %561 = vmatpush1.bf16.msra.mxu0 0
        %562 = vmatprep.subr.bf16.mxu0 0
        %563 = vmatpush1.bf16.msra.mxu0 0
        %564 = vmatprep.subr.bf16.mxu0 0
        %565 = vmatpush1.bf16.msra.mxu0 0
        %566 = vmatprep.subr.bf16.mxu0 0
        %567 = vmatpush1.bf16.msra.mxu0 0
        %568 = vmatprep.subr.bf16.mxu0 0
        %569 = vmatpush1.bf16.msra.mxu0 0
        %570 = vmatprep.subr.bf16.mxu0 0
        %571 = vmatpush1.bf16.msra.mxu0 0
        %572 = vmatprep.subr.bf16.mxu0 0
        %573 = vmatpush1.bf16.msra.mxu0 0
        %574 = vmatprep.subr.bf16.mxu0 0
        %575 = vmatpush1.bf16.msra.mxu0 0
        %576 = vmatprep.subr.bf16.mxu0 0
        %577 = vmatpush1.bf16.msra.mxu0 0
        %578 = vmatprep.subr.bf16.mxu0 0
        %579 = vmatpush1.bf16.msra.mxu0 0
        %580 = vmatprep.subr.bf16.mxu0 0
        %581 = vmatpush1.bf16.msra.mxu0 0
        %582 = vmatprep.subr.bf16.mxu0 0
        %583 = vmatpush1.bf16.msra.mxu0 0
        %584 = vmatprep.subr.bf16.mxu0 0
        %585 = vmatpush1.bf16.msra.mxu0 0
        %586 = vmatprep.subr.bf16.mxu0 0
        %587 = vmatpush1.bf16.msra.mxu0 0
        %588 = vmatprep.mubr.bf16.mxu0 0
        %589 = vmatmul.mubr.bf16.gmra.mrb[0].mxu0 %v488
        %v590 = vpop.f32.mrb[0].mxu0
        %v591 = vadd.f32 %v542, %v590
        %v592 = vpop.f32.mrb[0].mxu0
        %v593 = vpop.f32.mrb[0].mxu0
        %v594 = vpop.f32.mrb[0].mxu0
        %595 = vdwg.mxu0
        %v596 = vpack.c.bf16 %v591, %v591
        %597 = vst.msk [vmem:[%s415] sm:$0xf] %vm531, %v596
        %v598 = vld [vmem:[%s6] sm:$0xf]
        %v599 = vld [vmem:[%s6 + $0x4] sm:$0xf]
        %v600 = vld [vmem:[%s6 + $0x8] sm:$0xf]
        %v601 = vld [vmem:[%s6 + $0xc] sm:$0xf]
        %v602 = vld [vmem:[%s7] sm:$0x1]
        %v604 = vlaneseq
        %v605 = vshrl.u32 %v604, 7
        %v606 = vsub.s32 0, %v605
        %v607 = vrot.slane %v602, %v606
        %v613 = vunpack.c.l.b16 %v598
        %v614 = vunpack.c.l.b16 %v599
        %v615 = vunpack.c.l.b16 %v600
        %v616 = vunpack.c.l.b16 %v601
        %v617 = vpack.c.b16 %v614, %v613
        %v618 = vpack.c.b16 %v616, %v615
        %621 = vmatprep.subr.bf16.mxu0 0
        %622 = vmatpush1.bf16.msra.mxu0 %v617
        %623 = vmatprep.subr.bf16.mxu0 0
        %624 = vmatpush1.bf16.msra.mxu0 %v618
        %625 = vmatprep.subr.bf16.mxu0 0
        %626 = vmatpush1.bf16.msra.mxu0 0
        %627 = vmatprep.subr.bf16.mxu0 0
        %628 = vmatpush1.bf16.msra.mxu0 0
        %629 = vmatprep.subr.bf16.mxu0 0
        %630 = vmatpush1.bf16.msra.mxu0 0
        %631 = vmatprep.subr.bf16.mxu0 0
        %632 = vmatpush1.bf16.msra.mxu0 0
        %633 = vmatprep.subr.bf16.mxu0 0
        %634 = vmatpush1.bf16.msra.mxu0 0
        %635 = vmatprep.subr.bf16.mxu0 0
        %636 = vmatpush1.bf16.msra.mxu0 0
        %637 = vmatprep.subr.bf16.mxu0 0
        %638 = vmatpush1.bf16.msra.mxu0 0
        %639 = vmatprep.subr.bf16.mxu0 0
        %640 = vmatpush1.bf16.msra.mxu0 0
        %641 = vmatprep.subr.bf16.mxu0 0
        %642 = vmatpush1.bf16.msra.mxu0 0
        %643 = vmatprep.subr.bf16.mxu0 0
        %644 = vmatpush1.bf16.msra.mxu0 0
        %645 = vmatprep.subr.bf16.mxu0 0
        %646 = vmatpush1.bf16.msra.mxu0 0
        %647 = vmatprep.subr.bf16.mxu0 0
        %648 = vmatpush1.bf16.msra.mxu0 0
        %649 = vmatprep.subr.bf16.mxu0 0
        %650 = vmatpush1.bf16.msra.mxu0 0
        %651 = vmatprep.subr.bf16.mxu0 0
        %652 = vmatpush1.bf16.msra.mxu0 0
        %653 = vmatprep.mubr.bf16.mxu0 0
        %654 = vmatmul.mubr.bf16.gmra.mrb[0].mxu0 %v488
        %v655 = vpop.f32.mrb[0].mxu0
        %v656 = vadd.f32 %v607, %v655
        %v657 = vpop.f32.mrb[0].mxu0
        %v658 = vpop.f32.mrb[0].mxu0
        %v659 = vpop.f32.mrb[0].mxu0
        %660 = vdwg.mxu0
        %v661 = vpack.c.bf16 %v656, %v656
        %662 = vst.msk [vmem:[%s422] sm:$0xf] %vm531, %v661
        %s663 = sand.u32 %s231, 1
        %s664 = scalar_lea.sflag [#allocation4], %s663
        %s665 = sand.u32 %s231, 1
        %s666 = smul.addr %s665, 4
        %s667 = scalar_lea.vmem [#allocation5], %s666
        %s668 = sand.u32 %s29, 1
        %s669 = scalar_lea.sflag [#allocation7], %s668
        %s670 = sand.u32 %s259, 1
        %s671 = smul.addr %s670, 4
        %s672 = scalar_lea.vmem [#allocation6], %s671
        %s673 = sand.u32 %s29, 1
        %s674 = scalar_lea.sflag [#allocation7], %s673
        %s675 = sand.u32 %s287, 1
        %s676 = smul.addr %s675, 4
        %s677 = scalar_lea.vmem [#allocation8], %s676
        // Predicated region
        $region57: #{tpu_custom_call.1} parent=51 // pred_check
          %p678 = pneg %p241
        $region58: #{tpu_custom_call.1} parent=51 // pred_check_branch
          %680 = sbr.rel (%p678) target = $region60
        $region59: #{tpu_custom_call.1} parent=51 // pred_region
          %s682 = ssub.s32 64, 64
          %683 = vsyncadd %s664, %s682
          %s684 = sadd.s32 %s34, %s33
          %s685 = smul.addr %s684, 64
          %s686 = scalar_lea.hbm %s8, %s685
          %s688 = sshll.u32 %s667, 4
          %s689 = int_to_ptr.vmem [resolvable:$true] %s688
          %691 = dma.vmem_to_hbm [thread:$0]  %s689, 64, %s686, %s664
        $region60: #{tpu_custom_call.1} parent=51 // pred_fallthru
          _
        // Predicated region
        $region61: #{tpu_custom_call.1} parent=51 // pred_check
          %p692 = pneg %p269
        $region62: #{tpu_custom_call.1} parent=51 // pred_check_branch
          %694 = sbr.rel (%p692) target = $region64
        $region63: #{tpu_custom_call.1} parent=51 // pred_region
          %s696 = ssub.s32 64, 64
          %697 = vsyncadd %s669, %s696
          %s698 = sadd.s32 %s34, %s33
          %s699 = smul.addr %s698, 64
          %s700 = scalar_lea.hbm %s9, %s699
          %s702 = sshll.u32 %s672, 4
          %s703 = int_to_ptr.vmem [resolvable:$true] %s702
          %705 = dma.vmem_to_hbm [thread:$0]  %s703, 64, %s700, %s669
        $region64: #{tpu_custom_call.1} parent=51 // pred_fallthru
          _
        // Predicated region
        $region65: #{tpu_custom_call.1} parent=51 // pred_check
          %p706 = pneg %p297
        $region66: #{tpu_custom_call.1} parent=51 // pred_check_branch
          %708 = sbr.rel (%p706) target = $region68
        $region67: #{tpu_custom_call.1} parent=51 // pred_region
          %s710 = ssub.s32 64, 64
          %711 = vsyncadd %s674, %s710
          %s712 = sadd.s32 %s34, %s33
          %s713 = smul.addr %s712, 64
          %s714 = scalar_lea.hbm %s10, %s713
          %s716 = sshll.u32 %s677, 4
          %s717 = int_to_ptr.vmem [resolvable:$true] %s716
          %719 = dma.vmem_to_hbm [thread:$0]  %s717, 64, %s714, %s674
        $region68: #{tpu_custom_call.1} parent=51 // pred_fallthru
          _
      $region52: #{tpu_custom_call.1} parent=5 // pred_fallthru
        _
      %p720 = scmp.le.s32.totalorder 2, %s24
      // Predicated region
      $region69: #{tpu_custom_call.1} parent=5 // pred_check
        %p721 = pneg %p720
      $region70: #{tpu_custom_call.1} parent=5 // pred_check_branch
        %723 = sbr.rel (%p721) target = $region72
      $region71: #{tpu_custom_call.1} parent=5 // pred_region
        %s724 = ssub.s32 %s24, 2
        // Predicated region
        $region73: #{tpu_custom_call.1} parent=71 // pred_check
          %p725 = pneg %p247
        $region74: #{tpu_custom_call.1} parent=71 // pred_check_branch
          %727 = sbr.rel (%p725) target = $region76
        $region75: #{tpu_custom_call.1} parent=71 // pred_region
          %s728 = sand.u32 %s232, 1
          %s729 = scalar_lea.sflag [#allocation4], %s728
          %s730 = sand.u32 %s232, 1
          %s731 = smul.addr %s730, 4
          %s732 = scalar_lea.vmem [#allocation5], %s731
          %733 = dma.done %s729, 64
        $region76: #{tpu_custom_call.1} parent=71 // pred_fallthru
          _
        // Predicated region
        $region77: #{tpu_custom_call.1} parent=71 // pred_check
          %p734 = pneg %p275
        $region78: #{tpu_custom_call.1} parent=71 // pred_check_branch
          %736 = sbr.rel (%p734) target = $region80
        $region79: #{tpu_custom_call.1} parent=71 // pred_region
          %s737 = sand.u32 %s30, 1
          %s738 = scalar_lea.sflag [#allocation7], %s737
          %s739 = sand.u32 %s260, 1
          %s740 = smul.addr %s739, 4
          %s741 = scalar_lea.vmem [#allocation6], %s740
          %742 = dma.done %s738, 64
        $region80: #{tpu_custom_call.1} parent=71 // pred_fallthru
          _
        // Predicated region
        $region81: #{tpu_custom_call.1} parent=71 // pred_check
          %p743 = pneg %p303
        $region82: #{tpu_custom_call.1} parent=71 // pred_check_branch
          %745 = sbr.rel (%p743) target = $region84
        $region83: #{tpu_custom_call.1} parent=71 // pred_region
          %s746 = sand.u32 %s30, 1
          %s747 = scalar_lea.sflag [#allocation7], %s746
          %s748 = sand.u32 %s288, 1
          %s749 = smul.addr %s748, 4
          %s750 = scalar_lea.vmem [#allocation8], %s749
          %751 = dma.done %s747, 64
        $region84: #{tpu_custom_call.1} parent=71 // pred_fallthru
          _
      $region72: #{tpu_custom_call.1} parent=5 // pred_fallthru
        _
    $region6: #{tpu_custom_call.1} parent=1 // loop_footer
      %s28 = sadd.s32 1, %s24
    $region7: #{tpu_custom_call.1} parent=1 // loop_footer_branch
      %23 = sbr.rel target = $region3
    $region8: #{tpu_custom_call.1} parent=1 // loop_exit
      _
    %752 = vsyncpa [#allocation3], 1
    %s753 = scalar_lea.sflag [#allocation3], 1
    %754 = vsyncpa %s753, 1
    %755 = vsyncpa [#allocation4], 1
    %s756 = scalar_lea.sflag [#allocation4], 1
    %757 = vsyncpa %s756, 1
    %758 = vsyncpa [#allocation7], 1
    %s759 = scalar_lea.sflag [#allocation7], 1
    %760 = vsyncpa %s759, 1

// kernel: tpu_custom_call.1
$region0: #{tpu_custom_call.1}
  #allocation0 [shape = 'u32[]', space=smem, size = 0x4, offset = 0x4, fixed_abs, tag = 'smem constant byte address 0x4 - core index']
  #allocation1 [shape = 'u32[144,128]{1,0:T(1,128)}', space=vmem, size = 0x12000, scoped, tag = 'internal scratch']
  %s0 = inlined_call_operand.vmem [shape: f32[2,8,32], index: 0, kind: input, shape index: {}]
  %s1 = inlined_call_operand.vmem [shape: f32[2,6,32], index: 1, kind: input, shape index: {}]
  %s2 = inlined_call_operand.vmem [shape: bf16[32,32], index: 2, kind: input, shape index: {}]
  %s3 = inlined_call_operand.vmem [shape: f32[1,32], index: 3, kind: input, shape index: {}]
  %s4 = inlined_call_operand.hbm [shape: bf16[32,32], index: 4, kind: input, shape index: {}]
  %s5 = inlined_call_operand.vmem [shape: f32[1,32], index: 5, kind: input, shape index: {}]
  %s6 = inlined_call_operand.vmem [shape: bf16[32,32], index: 6, kind: input, shape index: {}]
  %s7 = inlined_call_operand.vmem [shape: f32[1,32], index: 7, kind: input, shape index: {}]
  %s8 = inlined_call_operand.hbm [shape: bf16[2,8,32], index: 8, kind: output, shape index: {0}]
  %s9 = inlined_call_operand.hbm [shape: bf16[2,8,32], index: 9, kind: output, shape index: {1}]
  %s10 = inlined_call_operand.hbm [shape: bf16[2,8,32], index: 10, kind: output, shape index: {2}]
  %11 = xla_tuple %s8, %s9, %s10
  %s12 = sld [smem:[#allocation0]]
  $region85: #{tpu_custom_call.1} parent=0
    _
  %s14 = ssub.s32 1, %s12
  %s15 = scalar_select 0, %s14, %s12
  $region1: #{tpu_custom_call.1} parent=0
    #allocation2 [shape = 'u8[8192]{0}', space=vmem, size = 0x2000, scoped, tag = 'input window, operand 4, single buffered']
    #allocation3 [shape = 's32[2]{0}', space=sflag, size = 0x8, scoped, tag = 'scoped memory for tpu_custom_call.1']
    #allocation4 [shape = 's32[2]{0}', space=sflag, size = 0x8, scoped, tag = 'scoped memory for tpu_custom_call.1']
    #allocation5 [shape = 'u8[4096]{0}', space=vmem, size = 0x1000, scoped, tag = 'output window, operand 0']
    #allocation6 [shape = 'u8[4096]{0}', space=vmem, size = 0x1000, scoped, tag = 'output window, operand 1']
    #allocation7 [shape = 's32[2]{0}', space=sflag, size = 0x8, scoped, tag = 'scoped memory for tpu_custom_call.1']
    #allocation8 [shape = 'u8[4096]{0}', space=vmem, size = 0x1000, scoped, tag = 'output window, operand 2']
    %16 = vsyncpa [#allocation3], 0
    %17 = vsyncpa [#allocation4], 0
    %s18 = scalar_lea.sflag [#allocation4], 1
    %19 = vsyncpa %s18, 0
    %20 = vsyncpa [#allocation7], 0
    %s21 = scalar_lea.sflag [#allocation7], 1
    %22 = vsyncpa %s21, 0
    loop: start=0, step=1, limit=4
    $region2: #{tpu_custom_call.1} parent=1 // loop_pre_header
      _
    $region3: #{tpu_custom_call.1} parent=1 // loop_header
      %s24 = sphi 0, %s28
      %p25 = scmp.ge.s32.totalorder %s24, 4
      %s31 = sphi 0, %s43
      %s32 = sphi 0, %s39
      %s33 = sphi 0, %s31
      %s34 = sphi 0, %s32
      %s35 = sphi 0, %s33
      %s36 = sphi 0, %s34
      %s48 = sphi 0, %s50
      %s51 = sphi 0, %s48
      %s52 = sphi 0, %s51
      %s68 = sphi 0, %s52
      %s74 = sphi 0, %s76
      %s77 = sphi 0, %s74
      %s78 = sphi 0, %s77
      %s94 = sphi 0, %s78
      %s98 = sphi 0, %s98
      %s100 = sphi 0, %s98
      %s101 = sphi 0, %s100
      %s115 = sphi 0, %s101
      %s119 = sphi 0, %s119
      %s121 = sphi 0, %s119
      %s122 = sphi 0, %s121
      %s136 = sphi 0, %s122
      %s140 = sphi 0, %s140
      %s142 = sphi 0, %s140
      %s143 = sphi 0, %s142
      %s157 = sphi 0, %s143
      %s161 = sphi 0, %s161
      %s163 = sphi 0, %s161
      %s164 = sphi 0, %s163
      %s178 = sphi 0, %s164
      %s182 = sphi 0, %s182
      %s184 = sphi 0, %s182
      %s185 = sphi 0, %s184
      %s199 = sphi 0, %s185
      %s203 = sphi 0, %s203
      %s205 = sphi 0, %s203
      %s206 = sphi 0, %s205
      %s220 = sphi 0, %s206
      %s228 = sphi 0, %s230
      %s231 = sphi 0, %s228
      %s232 = sphi 0, %s231
      %s248 = sphi 0, %s232
      %s256 = sphi 0, %s258
      %s259 = sphi 0, %s256
      %s260 = sphi 0, %s259
      %s276 = sphi 0, %s260
      %s284 = sphi 0, %s286
      %s287 = sphi 0, %s284
      %s288 = sphi 0, %s287
      %s304 = sphi 0, %s288
    $region4: #{tpu_custom_call.1} parent=1 // loop_header_branch
      %27 = sbr.rel (%p25) target = $region8
    $region5: #{tpu_custom_call.1} parent=1 // loop_body
      %s29 = ssub.s32 %s24, 1
      %s30 = ssub.s32 %s24, 2
      %s37 = sadd.s32 1, %s32
      %p38 = scmp.ge.s32.totalorder %s37, 1
      %s39 = scalar_select %p38, 0, %s37
      %s40 = sadd.s32 1, %s31
      %s41 = scalar_select %p38, %s40, %s31
      %p42 = scmp.ge.s32.totalorder %s41, 2
      %s43 = scalar_select %p42, 0, %s41
      %s44 = ssub.s32 %s31, %s43
      %s45 = ssub.s32 %s32, %s39
      %s46 = sor.u32 %s44, %s45
      %p47 = scmp.eq.s32.totalorder %s46, 0
      %s49 = sadd.s32 %s48, 1
      %s50 = scalar_select %p47, %s48, %s49
      %p53 = pneg %p47
      %p54 = scmp.eq.s32.totalorder %s24, 1
      %p55 = por %p53, %p54
      %p56 = scmp.ne.s32.totalorder %s48, %s51
      %p57 = scmp.eq.s32.totalorder %s24, 0
      %p58 = por %p56, %p57
      %p59 = scmp.ne.s32.totalorder %s48, %s51
      %p60 = scmp.eq.s32.totalorder %s29, 1
      %p61 = por %p59, %p60
      %p62 = scmp.ne.s32.totalorder %s51, %s52
      %p63 = scmp.eq.s32.totalorder %s29, 0
      %p64 = por %p62, %p63
      %p65 = scmp.ne.s32.totalorder %s51, %s52
      %p66 = scmp.eq.s32.totalorder %s30, 1
      %p67 = por %p65, %p66
      %p69 = scmp.ne.s32.totalorder %s52, %s68
      %p70 = scmp.eq.s32.totalorder %s30, 0
      %p71 = por %p69, %p70
      %s72 = ssub.s32 %s31, %s43
      %p73 = scmp.eq.s32.totalorder %s72, 0
      %s75 = sadd.s32 %s74, 1
      %s76 = scalar_select %p73, %s74, %s75
      %p79 = pneg %p73
      %p80 = scmp.eq.s32.totalorder %s24, 1
      %p81 = por %p79, %p80
      %p82 = scmp.ne.s32.totalorder %s74, %s77
      %p83 = scmp.eq.s32.totalorder %s24, 0
      %p84 = por %p82, %p83
      %p85 = scmp.ne.s32.totalorder %s74, %s77
      %p86 = scmp.eq.s32.totalorder %s29, 1
      %p87 = por %p85, %p86
      %p88 = scmp.ne.s32.totalorder %s77, %s78
      %p89 = scmp.eq.s32.totalorder %s29, 0
      %p90 = por %p88, %p89
      %p91 = scmp.ne.s32.totalorder %s77, %s78
      %p92 = scmp.eq.s32.totalorder %s30, 1
      %p93 = por %p91, %p92
      %p95 = scmp.ne.s32.totalorder %s78, %s94
      %p96 = scmp.eq.s32.totalorder %s30, 0
      %p97 = por %p95, %p96
      %s99 = sadd.s32 %s98, 1
      %p102 = scmp.eq.s32.totalorder %s24, 1
      %p103 = scmp.ne.s32.totalorder %s98, %s100
      %p104 = scmp.eq.s32.totalorder %s24, 0
      %p105 = por %p103, %p104
      %p106 = scmp.ne.s32.totalorder %s98, %s100
      %p107 = scmp.eq.s32.totalorder %s29, 1
      %p108 = por %p106, %p107
      %p109 = scmp.ne.s32.totalorder %s100, %s101
      %p110 = scmp.eq.s32.totalorder %s29, 0
      %p111 = por %p109, %p110
      %p112 = scmp.ne.s32.totalorder %s100, %s101
      %p113 = scmp.eq.s32.totalorder %s30, 1
      %p114 = por %p112, %p113
      %p116 = scmp.ne.s32.totalorder %s101, %s115
      %p117 = scmp.eq.s32.totalorder %s30, 0
      %p118 = por %p116, %p117
      %s120 = sadd.s32 %s119, 1
      %p123 = scmp.eq.s32.totalorder %s24, 1
      %p124 = scmp.ne.s32.totalorder %s119, %s121
      %p125 = scmp.eq.s32.totalorder %s24, 0
      %p126 = por %p124, %p125
      %p127 = scmp.ne.s32.totalorder %s119, %s121
      %p128 = scmp.eq.s32.totalorder %s29, 1
      %p129 = por %p127, %p128
      %p130 = scmp.ne.s32.totalorder %s121, %s122
      %p131 = scmp.eq.s32.totalorder %s29, 0
      %p132 = por %p130, %p131
      %p133 = scmp.ne.s32.totalorder %s121, %s122
      %p134 = scmp.eq.s32.totalorder %s30, 1
      %p135 = por %p133, %p134
      %p137 = scmp.ne.s32.totalorder %s122, %s136
      %p138 = scmp.eq.s32.totalorder %s30, 0
      %p139 = por %p137, %p138
      %s141 = sadd.s32 %s140, 1
      %p144 = scmp.eq.s32.totalorder %s24, 1
      %p145 = scmp.ne.s32.totalorder %s140, %s142
      %p146 = scmp.eq.s32.totalorder %s24, 0
      %p147 = por %p145, %p146
      %p148 = scmp.ne.s32.totalorder %s140, %s142
      %p149 = scmp.eq.s32.totalorder %s29, 1
      %p150 = por %p148, %p149
      %p151 = scmp.ne.s32.totalorder %s142, %s143
      %p152 = scmp.eq.s32.totalorder %s29, 0
      %p153 = por %p151, %p152
      %p154 = scmp.ne.s32.totalorder %s142, %s143
      %p155 = scmp.eq.s32.totalorder %s30, 1
      %p156 = por %p154, %p155
      %p158 = scmp.ne.s32.totalorder %s143, %s157
      %p159 = scmp.eq.s32.totalorder %s30, 0
      %p160 = por %p158, %p159
      %s162 = sadd.s32 %s161, 1
      %p165 = scmp.eq.s32.totalorder %s24, 1
      %p166 = scmp.ne.s32.totalorder %s161, %s163
      %p167 = scmp.eq.s32.totalorder %s24, 0
      %p168 = por %p166, %p167
      %p169 = scmp.ne.s32.totalorder %s161, %s163
      %p170 = scmp.eq.s32.totalorder %s29, 1
      %p171 = por %p169, %p170
      %p172 = scmp.ne.s32.totalorder %s163, %s164
      %p173 = scmp.eq.s32.totalorder %s29, 0
      %p174 = por %p172, %p173
      %p175 = scmp.ne.s32.totalorder %s163, %s164
      %p176 = scmp.eq.s32.totalorder %s30, 1
      %p177 = por %p175, %p176
      %p179 = scmp.ne.s32.totalorder %s164, %s178
      %p180 = scmp.eq.s32.totalorder %s30, 0
      %p181 = por %p179, %p180
      %s183 = sadd.s32 %s182, 1
      %p186 = scmp.eq.s32.totalorder %s24, 1
      %p187 = scmp.ne.s32.totalorder %s182, %s184
      %p188 = scmp.eq.s32.totalorder %s24, 0
      %p189 = por %p187, %p188
      %p190 = scmp.ne.s32.totalorder %s182, %s184
      %p191 = scmp.eq.s32.totalorder %s29, 1
      %p192 = por %p190, %p191
      %p193 = scmp.ne.s32.totalorder %s184, %s185
      %p194 = scmp.eq.s32.totalorder %s29, 0
      %p195 = por %p193, %p194
      %p196 = scmp.ne.s32.totalorder %s184, %s185
      %p197 = scmp.eq.s32.totalorder %s30, 1
      %p198 = por %p196, %p197
      %p200 = scmp.ne.s32.totalorder %s185, %s199
      %p201 = scmp.eq.s32.totalorder %s30, 0
      %p202 = por %p200, %p201
      %s204 = sadd.s32 %s203, 1
      %p207 = scmp.eq.s32.totalorder %s24, 1
      %p208 = scmp.ne.s32.totalorder %s203, %s205
      %p209 = scmp.eq.s32.totalorder %s24, 0
      %p210 = por %p208, %p209
      %p211 = scmp.ne.s32.totalorder %s203, %s205
      %p212 = scmp.eq.s32.totalorder %s29, 1
      %p213 = por %p211, %p212
      %p214 = scmp.ne.s32.totalorder %s205, %s206
      %p215 = scmp.eq.s32.totalorder %s29, 0
      %p216 = por %p214, %p215
      %p217 = scmp.ne.s32.totalorder %s205, %s206
      %p218 = scmp.eq.s32.totalorder %s30, 1
      %p219 = por %p217, %p218
      %p221 = scmp.ne.s32.totalorder %s206, %s220
      %p222 = scmp.eq.s32.totalorder %s30, 0
      %p223 = por %p221, %p222
      %s224 = ssub.s32 %s31, %s43
      %s225 = ssub.s32 %s32, %s39
      %s226 = sor.u32 %s224, %s225
      %p227 = scmp.eq.s32.totalorder %s226, 0
      %s229 = sadd.s32 %s228, 1
      %s230 = scalar_select %p227, %s228, %s229
      %p233 = pneg %p227
      %p234 = scmp.eq.s32.totalorder %s24, 1
      %p235 = por %p233, %p234
      %p236 = scmp.ne.s32.totalorder %s228, %s231
      %p237 = scmp.eq.s32.totalorder %s24, 0
      %p238 = por %p236, %p237
      %p239 = scmp.ne.s32.totalorder %s228, %s231
      %p240 = scmp.eq.s32.totalorder %s29, 1
      %p241 = por %p239, %p240
      %p242 = scmp.ne.s32.totalorder %s231, %s232
      %p243 = scmp.eq.s32.totalorder %s29, 0
      %p244 = por %p242, %p243
      %p245 = scmp.ne.s32.totalorder %s231, %s232
      %p246 = scmp.eq.s32.totalorder %s30, 1
      %p247 = por %p245, %p246
      %p249 = scmp.ne.s32.totalorder %s232, %s248
      %p250 = scmp.eq.s32.totalorder %s30, 0
      %p251 = por %p249, %p250
      %s252 = ssub.s32 %s31, %s43
      %s253 = ssub.s32 %s32, %s39
      %s254 = sor.u32 %s252, %s253
      %p255 = scmp.eq.s32.totalorder %s254, 0
      %s257 = sadd.s32 %s256, 1
      %s258 = scalar_select %p255, %s256, %s257
      %p261 = pneg %p255
      %p262 = scmp.eq.s32.totalorder %s24, 1
      %p263 = por %p261, %p262
      %p264 = scmp.ne.s32.totalorder %s256, %s259
      %p265 = scmp.eq.s32.totalorder %s24, 0
      %p266 = por %p264, %p265
      %p267 = scmp.ne.s32.totalorder %s256, %s259
      %p268 = scmp.eq.s32.totalorder %s29, 1
      %p269 = por %p267, %p268
      %p270 = scmp.ne.s32.totalorder %s259, %s260
      %p271 = scmp.eq.s32.totalorder %s29, 0
      %p272 = por %p270, %p271
      %p273 = scmp.ne.s32.totalorder %s259, %s260
      %p274 = scmp.eq.s32.totalorder %s30, 1
      %p275 = por %p273, %p274
      %p277 = scmp.ne.s32.totalorder %s260, %s276
      %p278 = scmp.eq.s32.totalorder %s30, 0
      %p279 = por %p277, %p278
      %s280 = ssub.s32 %s31, %s43
      %s281 = ssub.s32 %s32, %s39
      %s282 = sor.u32 %s280, %s281
      %p283 = scmp.eq.s32.totalorder %s282, 0
      %s285 = sadd.s32 %s284, 1
      %s286 = scalar_select %p283, %s284, %s285
      %p289 = pneg %p283
      %p290 = scmp.eq.s32.totalorder %s24, 1
      %p291 = por %p289, %p290
      %p292 = scmp.ne.s32.totalorder %s284, %s287
      %p293 = scmp.eq.s32.totalorder %s24, 0
      %p294 = por %p292, %p293
      %p295 = scmp.ne.s32.totalorder %s284, %s287
      %p296 = scmp.eq.s32.totalorder %s29, 1
      %p297 = por %p295, %p296
      %p298 = scmp.ne.s32.totalorder %s287, %s288
      %p299 = scmp.eq.s32.totalorder %s29, 0
      %p300 = por %p298, %p299
      %p301 = scmp.ne.s32.totalorder %s287, %s288
      %p302 = scmp.eq.s32.totalorder %s30, 1
      %p303 = por %p301, %p302
      %p305 = scmp.ne.s32.totalorder %s288, %s304
      %p306 = scmp.eq.s32.totalorder %s30, 0
      %p307 = por %p305, %p306
      %p308 = scmp.le.s32.totalorder 1, %s24
      %p309 = scmp.lt.s32.totalorder %s24, 3
      %p310 = pnand %p308, %p309
      %p311 = pneg %p310
      // Predicated region
      $region9: #{tpu_custom_call.1} parent=5 // pred_check
        _
      $region10: #{tpu_custom_call.1} parent=5 // pred_check_branch
        %313 = sbr.rel (%p310) target = $region12
      $region11: #{tpu_custom_call.1} parent=5 // pred_region
        %s314 = ssub.s32 %s24, 1
        // Predicated region
        $region13: #{tpu_custom_call.1} parent=11 // pred_check
          %p315 = pneg %p111
        $region14: #{tpu_custom_call.1} parent=11 // pred_check_branch
          %317 = sbr.rel (%p315) target = $region16
        $region15: #{tpu_custom_call.1} parent=11 // pred_region
          _
        $region16: #{tpu_custom_call.1} parent=11 // pred_fallthru
          _
        // Predicated region
        $region17: #{tpu_custom_call.1} parent=11 // pred_check
          %p318 = pneg %p132
        $region18: #{tpu_custom_call.1} parent=11 // pred_check_branch
          %320 = sbr.rel (%p318) target = $region20
        $region19: #{tpu_custom_call.1} parent=11 // pred_region
          _
        $region20: #{tpu_custom_call.1} parent=11 // pred_fallthru
          _
        // Predicated region
        $region21: #{tpu_custom_call.1} parent=11 // pred_check
          %p321 = pneg %p153
        $region22: #{tpu_custom_call.1} parent=11 // pred_check_branch
          %323 = sbr.rel (%p321) target = $region24
        $region23: #{tpu_custom_call.1} parent=11 // pred_region
          %s325 = ssub.s32 256, 256
          %326 = vsyncadd [#allocation3], %s325
          %s327 = sshll.u32 [#allocation2], 4
          %s328 = int_to_ptr.vmem [resolvable:$true] %s327
          %333 = dma.hbm_to_vmem [thread:$0]  %s4, 256, %s328, [#allocation3], 64, 64, 4
        $region24: #{tpu_custom_call.1} parent=11 // pred_fallthru
          _
        // Predicated region
        $region25: #{tpu_custom_call.1} parent=11 // pred_check
          %p334 = pneg %p174
        $region26: #{tpu_custom_call.1} parent=11 // pred_check_branch
          %336 = sbr.rel (%p334) target = $region28
        $region27: #{tpu_custom_call.1} parent=11 // pred_region
          _
        $region28: #{tpu_custom_call.1} parent=11 // pred_fallthru
          _
        // Predicated region
        $region29: #{tpu_custom_call.1} parent=11 // pred_check
          %p337 = pneg %p195
        $region30: #{tpu_custom_call.1} parent=11 // pred_check_branch
          %339 = sbr.rel (%p337) target = $region32
        $region31: #{tpu_custom_call.1} parent=11 // pred_region
          _
        $region32: #{tpu_custom_call.1} parent=11 // pred_fallthru
          _
        // Predicated region
        $region33: #{tpu_custom_call.1} parent=11 // pred_check
          %p340 = pneg %p216
        $region34: #{tpu_custom_call.1} parent=11 // pred_check_branch
          %342 = sbr.rel (%p340) target = $region36
        $region35: #{tpu_custom_call.1} parent=11 // pred_region
          _
        $region36: #{tpu_custom_call.1} parent=11 // pred_fallthru
          _
      $region12: #{tpu_custom_call.1} parent=5 // pred_fallthru
        _
      %p343 = scmp.lt.s32.totalorder %s24, 2
      // Predicated region
      $region37: #{tpu_custom_call.1} parent=5 // pred_check
        %p344 = pneg %p343
      $region38: #{tpu_custom_call.1} parent=5 // pred_check_branch
        %346 = sbr.rel (%p344) target = $region40
      $region39: #{tpu_custom_call.1} parent=5 // pred_region
        // Predicated region
        $region41: #{tpu_custom_call.1} parent=39 // pred_check
          %p347 = pneg %p58
        $region42: #{tpu_custom_call.1} parent=39 // pred_check_branch
          %349 = sbr.rel (%p347) target = $region44
        $region43: #{tpu_custom_call.1} parent=39 // pred_region
          %p350 = scmp.lt.s32.totalorder %s31, 1
          %s351 = scalar_select %p350, %s31, 1
          %p352 = scmp.lt.s32.totalorder %s32, 0
          %s353 = scalar_select %p352, %s32, 0
          %s354 = sadd.s32 %s353, %s351
          %s355 = smul.addr %s354, 8
          %s356 = scalar_lea.vmem %s0, %s355
        $region44: #{tpu_custom_call.1} parent=39 // pred_fallthru
          _
        // Predicated region
        $region45: #{tpu_custom_call.1} parent=39 // pred_check
          %p357 = pneg %p84
        $region46: #{tpu_custom_call.1} parent=39 // pred_check_branch
          %359 = sbr.rel (%p357) target = $region48
        $region47: #{tpu_custom_call.1} parent=39 // pred_region
          %p360 = scmp.lt.s32.totalorder %s31, 1
          %s361 = scalar_select %p360, %s31, 1
          %s362 = smul.addr %s361, 8
          %s363 = scalar_lea.vmem %s1, %s362
        $region48: #{tpu_custom_call.1} parent=39 // pred_fallthru
          _
      $region40: #{tpu_custom_call.1} parent=5 // pred_fallthru
        _
      %p364 = scmp.le.s32.totalorder 1, %s24
      %p365 = scmp.lt.s32.totalorder %s24, 3
      %p366 = pnand %p364, %p365
      %p367 = pneg %p366
      // Predicated region
      $region49: #{tpu_custom_call.1} parent=5 // pred_check
        _
      $region50: #{tpu_custom_call.1} parent=5 // pred_check_branch
        %369 = sbr.rel (%p366) target = $region52
      $region51: #{tpu_custom_call.1} parent=5 // pred_region
        %s370 = ssub.s32 %s24, 1
        // Predicated region
        $region53: #{tpu_custom_call.1} parent=51 // pred_check
          %p371 = pneg %p153
        $region54: #{tpu_custom_call.1} parent=51 // pred_check_branch
          %373 = sbr.rel (%p371) target = $region56
        $region55: #{tpu_custom_call.1} parent=51 // pred_region
          %374 = dma.done [#allocation3], 256
        $region56: #{tpu_custom_call.1} parent=51 // pred_fallthru
          _
        %p375 = scmp.lt.s32.totalorder %s33, 1
        %s376 = scalar_select %p375, %s33, 1
        %p377 = scmp.lt.s32.totalorder %s34, 0
        %s378 = scalar_select %p377, %s34, 0
        %s379 = sadd.s32 %s378, %s376
        %s380 = smul.addr %s379, 8
        %s381 = scalar_lea.vmem %s0, %s380
        %p382 = pneg %p64
        %p383 = pneg %p61
        %p384 = scmp.lt.s32.totalorder %s33, 1
        %s385 = scalar_select %p384, %s33, 1
        %s386 = smul.addr %s385, 8
        %s387 = scalar_lea.vmem %s1, %s386
        %p388 = pneg %p90
        %p389 = pneg %p87
        %p390 = pneg %p111
        %p391 = pneg %p108
        %p392 = pneg %p132
        %p393 = pneg %p129
        %p394 = pneg %p153
        %p395 = pneg %p150
        %p396 = pneg %p174
        %p397 = pneg %p171
        %p398 = pneg %p195
        %p399 = pneg %p192
        %p400 = pneg %p216
        %p401 = pneg %p213
        %p402 = pneg %p244
        %p403 = pneg %p241
        %s404 = sand.u32 %s231, 1
        %s405 = scalar_lea.sflag [#allocation4], %s404
        %s406 = sand.u32 %s231, 1
        %s407 = smul.addr %s406, 4
        %s408 = scalar_lea.vmem [#allocation5], %s407
        %p409 = pneg %p272
        %p410 = pneg %p269
        %s411 = sand.u32 %s29, 1
        %s412 = scalar_lea.sflag [#allocation7], %s411
        %s413 = sand.u32 %s259, 1
        %s414 = smul.addr %s413, 4
        %s415 = scalar_lea.vmem [#allocation6], %s414
        %p416 = pneg %p300
        %p417 = pneg %p297
        %s418 = sand.u32 %s29, 1
        %s419 = scalar_lea.sflag [#allocation7], %s418
        %s420 = sand.u32 %s287, 1
        %s421 = smul.addr %s420, 4
        %s422 = scalar_lea.vmem [#allocation8], %s421
        %p423 = scmp.lt.s32.totalorder %s33, 1
        %s424 = scalar_select %p423, %s33, 1
        %p425 = scmp.lt.s32.totalorder %s34, 0
        %s426 = scalar_select %p425, %s34, 0
        %s427 = sadd.s32 %s426, %s424
        %s428 = smul.addr %s427, 8
        %s429 = scalar_lea.vmem %s0, %s428
        %p430 = scmp.lt.s32.totalorder %s33, 1
        %s431 = scalar_select %p430, %s33, 1
        %s432 = smul.addr %s431, 8
        %s433 = scalar_lea.vmem %s1, %s432
        %v435 = vld [vmem:[%s429] sm:$0xff]
        %v436 = vld [vmem:[%s433] sm:$0x3f]
        %vm437 = vcmask 261120
        %v438 = vsel %vm437, %v435, 0.0
        %439 = vadd.xlane.f32.xlu0 %v438
        %v440 = vpop.xlane.xlu0 %439
        %v441 = vrcp.pop 32.0
        %v442 = vmul.f32 %v440, %v441
        %v443 = vsub.f32 %v435, %v442
        %v444 = vmul.f32 %v443, %v443
        %v445 = vsel %vm437, %v444, 0.0
        %446 = vadd.xlane.f32.xlu0 %v445
        %v447 = vpop.xlane.xlu0 %446
        %v448 = vmul.f32 %v447, %v441
        %v449 = vadd.f32 %v448, 1e-06
        %v450 = vrsqrt.pop %v449
        %v451 = vmul.f32 %v443, %v450
        %v452 = vadd.f32 %v436, 1.0
        %v453 = vlaneseq
        %v454 = vshrl.u32 %v453, 7
        %v455 = vsub.s32 1, %v454
        %v456 = vrot.slane %v452, %v455
        %v457 = vmul.f32 %v451, %v456
        %v458 = vlaneseq
        %v459 = vshrl.u32 %v458, 7
        %v460 = vsub.s32 0, %v459
        %v461 = vrot.slane %v436, %v460
        %v462 = vadd.f32 %v457, %v461
        %v463 = vpack.c.bf16 %v462, %v462
        %v464 = vld [vmem:[%s2] sm:$0xf]
        %v465 = vld [vmem:[%s2 + $0x4] sm:$0xf]
        %v466 = vld [vmem:[%s2 + $0x8] sm:$0xf]
        %v467 = vld [vmem:[%s2 + $0xc] sm:$0xf]
        %v468 = vld [vmem:[%s3] sm:$0x1]
        %v470 = vlaneseq
        %v471 = vshrl.u32 %v470, 7
        %v472 = vsub.s32 0, %v471
        %v473 = vrot.slane %v468, %v472
        %v479 = vunpack.c.l.b16 %v464
        %v480 = vunpack.c.l.b16 %v465
        %v481 = vunpack.c.l.b16 %v466
        %v482 = vunpack.c.l.b16 %v467
        %v483 = vpack.c.b16 %v480, %v479
        %v484 = vpack.c.b16 %v482, %v481
        %v488 = vsel %vm437, %v463, 0
        %490 = vmatprep.subr.bf16.mxu0 0
        %491 = vmatpush1.bf16.msra.mxu0 %v483
        %492 = vmatprep.subr.bf16.mxu0 0
        %493 = vmatpush1.bf16.msra.mxu0 %v484
        %494 = vmatprep.subr.bf16.mxu0 0
        %495 = vmatpush1.bf16.msra.mxu0 0
        %496 = vmatprep.subr.bf16.mxu0 0
        %497 = vmatpush1.bf16.msra.mxu0 0
        %498 = vmatprep.subr.bf16.mxu0 0
        %499 = vmatpush1.bf16.msra.mxu0 0
        %500 = vmatprep.subr.bf16.mxu0 0
        %501 = vmatpush1.bf16.msra.mxu0 0
        %502 = vmatprep.subr.bf16.mxu0 0
        %503 = vmatpush1.bf16.msra.mxu0 0
        %504 = vmatprep.subr.bf16.mxu0 0
        %505 = vmatpush1.bf16.msra.mxu0 0
        %506 = vmatprep.subr.bf16.mxu0 0
        %507 = vmatpush1.bf16.msra.mxu0 0
        %508 = vmatprep.subr.bf16.mxu0 0
        %509 = vmatpush1.bf16.msra.mxu0 0
        %510 = vmatprep.subr.bf16.mxu0 0
        %511 = vmatpush1.bf16.msra.mxu0 0
        %512 = vmatprep.subr.bf16.mxu0 0
        %513 = vmatpush1.bf16.msra.mxu0 0
        %514 = vmatprep.subr.bf16.mxu0 0
        %515 = vmatpush1.bf16.msra.mxu0 0
        %516 = vmatprep.subr.bf16.mxu0 0
        %517 = vmatpush1.bf16.msra.mxu0 0
        %518 = vmatprep.subr.bf16.mxu0 0
        %519 = vmatpush1.bf16.msra.mxu0 0
        %520 = vmatprep.subr.bf16.mxu0 0
        %521 = vmatpush1.bf16.msra.mxu0 0
        %522 = vmatprep.mubr.bf16.mxu0 0
        %523 = vmatmul.mubr.bf16.gmra.mrb[0].mxu0 %v488
        %v524 = vpop.f32.mrb[0].mxu0
        %v525 = vadd.f32 %v473, %v524
        %v526 = vpop.f32.mrb[0].mxu0
        %v527 = vpop.f32.mrb[0].mxu0
        %v528 = vpop.f32.mrb[0].mxu0
        %529 = vdwg.mxu0
        %v530 = vpack.c.bf16 %v525, %v525
        %vm531 = vcmask 257024
        %532 = vst.msk [vmem:[%s408] sm:$0xf] %vm531, %v530
        %v533 = vld [vmem:[#allocation2] sm:$0xf]
        %v534 = vld [vmem:[#allocation2 + $0x4] sm:$0xf]
        %v535 = vld [vmem:[#allocation2 + $0x8] sm:$0xf]
        %v536 = vld [vmem:[#allocation2 + $0xc] sm:$0xf]
        %v537 = vld [vmem:[%s5] sm:$0x1]
        %v539 = vlaneseq
        %v540 = vshrl.u32 %v539, 7
        %v541 = vsub.s32 0, %v540
        %v542 = vrot.slane %v537, %v541
        %v548 = vunpack.c.l.b16 %v533
        %v549 = vunpack.c.l.b16 %v534
        %v550 = vunpack.c.l.b16 %v535
        %v551 = vunpack.c.l.b16 %v536
        %v552 = vpack.c.b16 %v549, %v548
        %v553 = vpack.c.b16 %v551, %v550
        %556 = vmatprep.subr.bf16.mxu0 0
        %557 = vmatpush1.bf16.msra.mxu0 %v552
        %558 = vmatprep.subr.bf16.mxu0 0
        %559 = vmatpush1.bf16.msra.mxu0 %v553
        %560 = vmatprep.subr.bf16.mxu0 0
        %561 = vmatpush1.bf16.msra.mxu0 0
        %562 = vmatprep.subr.bf16.mxu0 0
        %563 = vmatpush1.bf16.msra.mxu0 0
        %564 = vmatprep.subr.bf16.mxu0 0
        %565 = vmatpush1.bf16.msra.mxu0 0
        %566 = vmatprep.subr.bf16.mxu0 0
        %567 = vmatpush1.bf16.msra.mxu0 0
        %568 = vmatprep.subr.bf16.mxu0 0
        %569 = vmatpush1.bf16.msra.mxu0 0
        %570 = vmatprep.subr.bf16.mxu0 0
        %571 = vmatpush1.bf16.msra.mxu0 0
        %572 = vmatprep.subr.bf16.mxu0 0
        %573 = vmatpush1.bf16.msra.mxu0 0
        %574 = vmatprep.subr.bf16.mxu0 0
        %575 = vmatpush1.bf16.msra.mxu0 0
        %576 = vmatprep.subr.bf16.mxu0 0
        %577 = vmatpush1.bf16.msra.mxu0 0
        %578 = vmatprep.subr.bf16.mxu0 0
        %579 = vmatpush1.bf16.msra.mxu0 0
        %580 = vmatprep.subr.bf16.mxu0 0
        %581 = vmatpush1.bf16.msra.mxu0 0
        %582 = vmatprep.subr.bf16.mxu0 0
        %583 = vmatpush1.bf16.msra.mxu0 0
        %584 = vmatprep.subr.bf16.mxu0 0
        %585 = vmatpush1.bf16.msra.mxu0 0
        %586 = vmatprep.subr.bf16.mxu0 0
        %587 = vmatpush1.bf16.msra.mxu0 0
        %588 = vmatprep.mubr.bf16.mxu0 0
        %589 = vmatmul.mubr.bf16.gmra.mrb[0].mxu0 %v488
        %v590 = vpop.f32.mrb[0].mxu0
        %v591 = vadd.f32 %v542, %v590
        %v592 = vpop.f32.mrb[0].mxu0
        %v593 = vpop.f32.mrb[0].mxu0
        %v594 = vpop.f32.mrb[0].mxu0
        %595 = vdwg.mxu0
        %v596 = vpack.c.bf16 %v591, %v591
        %597 = vst.msk [vmem:[%s415] sm:$0xf] %vm531, %v596
        %v598 = vld [vmem:[%s6] sm:$0xf]
        %v599 = vld [vmem:[%s6 + $0x4] sm:$0xf]
        %v600 = vld [vmem:[%s6 + $0x8] sm:$0xf]
        %v601 = vld [vmem:[%s6 + $0xc] sm:$0xf]
        %v602 = vld [vmem:[%s7] sm:$0x1]
        %v604 = vlaneseq
        %v605 = vshrl.u32 %v604, 7
        %v606 = vsub.s32 0, %v605
        %v607 = vrot.slane %v602, %v606
        %v613 = vunpack.c.l.b16 %v598
        %v614 = vunpack.c.l.b16 %v599
        %v615 = vunpack.c.l.b16 %v600
        %v616 = vunpack.c.l.b16 %v601
        %v617 = vpack.c.b16 %v614, %v613
        %v618 = vpack.c.b16 %v616, %v615
        %621 = vmatprep.subr.bf16.mxu0 0
        %622 = vmatpush1.bf16.msra.mxu0 %v617
        %623 = vmatprep.subr.bf16.mxu0 0
        %624 = vmatpush1.bf16.msra.mxu0 %v618
        %625 = vmatprep.subr.bf16.mxu0 0
        %626 = vmatpush1.bf16.msra.mxu0 0
        %627 = vmatprep.subr.bf16.mxu0 0
        %628 = vmatpush1.bf16.msra.mxu0 0
        %629 = vmatprep.subr.bf16.mxu0 0
        %630 = vmatpush1.bf16.msra.mxu0 0
        %631 = vmatprep.subr.bf16.mxu0 0
        %632 = vmatpush1.bf16.msra.mxu0 0
        %633 = vmatprep.subr.bf16.mxu0 0
        %634 = vmatpush1.bf16.msra.mxu0 0
        %635 = vmatprep.subr.bf16.mxu0 0
        %636 = vmatpush1.bf16.msra.mxu0 0
        %637 = vmatprep.subr.bf16.mxu0 0
        %638 = vmatpush1.bf16.msra.mxu0 0
        %639 = vmatprep.subr.bf16.mxu0 0
        %640 = vmatpush1.bf16.msra.mxu0 0
        %641 = vmatprep.subr.bf16.mxu0 0
        %642 = vmatpush1.bf16.msra.mxu0 0
        %643 = vmatprep.subr.bf16.mxu0 0
        %644 = vmatpush1.bf16.msra.mxu0 0
        %645 = vmatprep.subr.bf16.mxu0 0
        %646 = vmatpush1.bf16.msra.mxu0 0
        %647 = vmatprep.subr.bf16.mxu0 0
        %648 = vmatpush1.bf16.msra.mxu0 0
        %649 = vmatprep.subr.bf16.mxu0 0
        %650 = vmatpush1.bf16.msra.mxu0 0
        %651 = vmatprep.subr.bf16.mxu0 0
        %652 = vmatpush1.bf16.msra.mxu0 0
        %653 = vmatprep.mubr.bf16.mxu0 0
        %654 = vmatmul.mubr.bf16.gmra.mrb[0].mxu0 %v488
        %v655 = vpop.f32.mrb[0].mxu0
        %v656 = vadd.f32 %v607, %v655
        %v657 = vpop.f32.mrb[0].mxu0
        %v658 = vpop.f32.mrb[0].mxu0
        %v659 = vpop.f32.mrb[0].mxu0
        %660 = vdwg.mxu0
        %v661 = vpack.c.bf16 %v656, %v656
        %662 = vst.msk [vmem:[%s422] sm:$0xf] %vm531, %v661
        %s663 = sand.u32 %s231, 1
        %s664 = scalar_lea.sflag [#allocation4], %s663
        %s665 = sand.u32 %s231, 1
        %s666 = smul.addr %s665, 4
        %s667 = scalar_lea.vmem [#allocation5], %s666
        %s668 = sand.u32 %s29, 1
        %s669 = scalar_lea.sflag [#allocation7], %s668
        %s670 = sand.u32 %s259, 1
        %s671 = smul.addr %s670, 4
        %s672 = scalar_lea.vmem [#allocation6], %s671
        %s673 = sand.u32 %s29, 1
        %s674 = scalar_lea.sflag [#allocation7], %s673
        %s675 = sand.u32 %s287, 1
        %s676 = smul.addr %s675, 4
        %s677 = scalar_lea.vmem [#allocation8], %s676
        // Predicated region
        $region57: #{tpu_custom_call.1} parent=51 // pred_check
          %p678 = pneg %p241
        $region58: #{tpu_custom_call.1} parent=51 // pred_check_branch
          %680 = sbr.rel (%p678) target = $region60
        $region59: #{tpu_custom_call.1} parent=51 // pred_region
          %s682 = ssub.s32 64, 64
          %683 = vsyncadd %s664, %s682
          %s684 = sadd.s32 %s34, %s33
          %s685 = smul.addr %s684, 64
          %s686 = scalar_lea.hbm %s8, %s685
          %s688 = sshll.u32 %s667, 4
          %s689 = int_to_ptr.vmem [resolvable:$true] %s688
          %691 = dma.vmem_to_hbm [thread:$0]  %s689, 64, %s686, %s664
        $region60: #{tpu_custom_call.1} parent=51 // pred_fallthru
          _
        // Predicated region
        $region61: #{tpu_custom_call.1} parent=51 // pred_check
          %p692 = pneg %p269
        $region62: #{tpu_custom_call.1} parent=51 // pred_check_branch
          %694 = sbr.rel (%p692) target = $region64
        $region63: #{tpu_custom_call.1} parent=51 // pred_region
          %s696 = ssub.s32 64, 64
          %697 = vsyncadd %s669, %s696
          %s698 = sadd.s32 %s34, %s33
          %s699 = smul.addr %s698, 64
          %s700 = scalar_lea.hbm %s9, %s699
          %s702 = sshll.u32 %s672, 4
          %s703 = int_to_ptr.vmem [resolvable:$true] %s702
          %705 = dma.vmem_to_hbm [thread:$0]  %s703, 64, %s700, %s669
        $region64: #{tpu_custom_call.1} parent=51 // pred_fallthru
          _
        // Predicated region
        $region65: #{tpu_custom_call.1} parent=51 // pred_check
          %p706 = pneg %p297
        $region66: #{tpu_custom_call.1} parent=51 // pred_check_branch
          %708 = sbr.rel (%p706) target = $region68
        $region67: #{tpu_custom_call.1} parent=51 // pred_region
          %s710 = ssub.s32 64, 64
          %711 = vsyncadd %s674, %s710
          %s712 = sadd.s32 %s34, %s33
          %s713 = smul.addr %s712, 64
          %s714 = scalar_lea.hbm %s10, %s713
          %s716 = sshll.u32 %s677, 4
          %s717 = int_to_ptr.vmem [resolvable:$true] %s716
          %719 = dma.vmem_to_hbm [thread:$0]  %s717, 64, %s714, %s674
        $region68: #{tpu_custom_call.1} parent=51 // pred_fallthru
          _
      $region52: #{tpu_custom_call.1} parent=5 // pred_fallthru
        _
      %p720 = scmp.le.s32.totalorder 2, %s24
      // Predicated region
      $region69: #{tpu_custom_call.1} parent=5 // pred_check
        %p721 = pneg %p720
      $region70: #{tpu_custom_call.1} parent=5 // pred_check_branch
        %723 = sbr.rel (%p721) target = $region72
      $region71: #{tpu_custom_call.1} parent=5 // pred_region
        %s724 = ssub.s32 %s24, 2
        // Predicated region
        $region73: #{tpu_custom_call.1} parent=71 // pred_check
          %p725 = pneg %p247
        $region74: #{tpu_custom_call.1} parent=71 // pred_check_branch
          %727 = sbr.rel (%p725) target = $region76
        $region75: #{tpu_custom_call.1} parent=71 // pred_region
          %s728 = sand.u32 %s232, 1
          %s729 = scalar_lea.sflag [#allocation4], %s728
          %s730 = sand.u32 %s232, 1
          %s731 = smul.addr %s730, 4
          %s732 = scalar_lea.vmem [#allocation5], %s731
          %733 = dma.done %s729, 64
        $region76: #{tpu_custom_call.1} parent=71 // pred_fallthru
          _
        // Predicated region
        $region77: #{tpu_custom_call.1} parent=71 // pred_check
          %p734 = pneg %p275
        $region78: #{tpu_custom_call.1} parent=71 // pred_check_branch
          %736 = sbr.rel (%p734) target = $region80
        $region79: #{tpu_custom_call.1} parent=71 // pred_region
          %s737 = sand.u32 %s30, 1
          %s738 = scalar_lea.sflag [#allocation7], %s737
          %s739 = sand.u32 %s260, 1
          %s740 = smul.addr %s739, 4
          %s741 = scalar_lea.vmem [#allocation6], %s740
          %742 = dma.done %s738, 64
        $region80: #{tpu_custom_call.1} parent=71 // pred_fallthru
          _
        // Predicated region
        $region81: #{tpu_custom_call.1} parent=71 // pred_check
          %p743 = pneg %p303
        $region82: #{tpu_custom_call.1} parent=71 // pred_check_branch
          %745 = sbr.rel (%p743) target = $region84
        $region83: #{tpu_custom_call.1} parent=71 // pred_region
          %s746 = sand.u32 %s30, 1
          %s747 = scalar_lea.sflag [#allocation7], %s746
          %s748 = sand.u32 %s288, 1
          %s749 = smul.addr %s748, 4
          %s750 = scalar_lea.vmem [#allocation8], %s749
          %751 = dma.done %s747, 64
        $region84: #{tpu_custom_call.1} parent=71 // pred_fallthru
          _
      $region72: #{tpu_custom_call.1} parent=5 // pred_fallthru
        _
    $region6: #{tpu_custom_call.1} parent=1 // loop_footer
      %s28 = sadd.s32 1, %s24
    $region7: #{tpu_custom_call.1} parent=1 // loop_footer_branch
      %23 = sbr.rel target = $region3
    $region8: #{tpu_custom_call.1} parent=1 // loop_exit
      _
    %752 = vsyncpa [#allocation3], 1
    %s753 = scalar_lea.sflag [#allocation3], 1
    %754 = vsyncpa %s753, 1
    %755 = vsyncpa [#allocation4], 1
    %s756 = scalar_lea.sflag [#allocation4], 1
    %757 = vsyncpa %s756, 1
    %758 = vsyncpa [#allocation7], 1
    %s759 = scalar_lea.sflag [#allocation7], 1
    %760 = vsyncpa %s759, 1

</llo_original>
